<compile_context>
chip_gen: v5e
topology: v5e:2x2
jax: 0.10.0
libtpu: 0.0.40
codegen_flags: <defaults>
</compile_context>

<pallas_src>
import jax
import jax.numpy as jnp
from jax.experimental import pallas as pl
from jax.experimental.pallas import tpu as pltpu

_INV_SQRT2 = 0.7071067811865476


def _gelu_exact(y):
    # Exact (erf-based) GELU, matching torch.nn.GELU() default.
    return 0.5 * y * (1.0 + jax.lax.erf(y * _INV_SQRT2))


# --------------------------- kernels ---------------------------

def mlp_kernel_wres(x_ref, w_ref, b_ref, o_ref):
    """1-D grid over B tiles; full W^T resident in VMEM -> no K reduction."""
    x = x_ref[...].astype(w_ref.dtype)          # f32 -> bf16 in-VPU, hides under DMA
    y = jnp.dot(x, w_ref[...], preferred_element_type=jnp.float32)
    y = _gelu_exact(y + b_ref[...])
    # Dropout: module default p = 0.0 -> identity.
    # TODO(synk): stochastic dropout via pltpu.prng_random_bits if p > 0 is ever needed.
    o_ref[...] = y.astype(o_ref.dtype)


def mlp_kernel_tiled(x_ref, w_ref, b_ref, o_ref):
    """3-D grid (B, N, K). The f32 output block is the accumulator: its
    index_map ignores K, so it stays resident across the reduction."""
    k = pl.program_id(2)

    @pl.when(k == 0)
    def _init():
        o_ref[...] = jnp.zeros_like(o_ref)

    x = x_ref[...].astype(w_ref.dtype)
    o_ref[...] += jnp.dot(x, w_ref[...], preferred_element_type=jnp.float32)

    @pl.when(k == pl.num_programs(2) - 1)
    def _epilogue():
        o_ref[...] = _gelu_exact(o_ref[...] + b_ref[...])
        # Dropout p = 0.0 -> identity (see TODO above).


# --------------------------- host-side helpers ---------------------------

def _pick_tile(dim, target, mult):
    """Largest multiple of `mult` that divides `dim` and is <= target.
    Falls back to the full dimension if no such divisor exists."""
    t = (min(target, dim) // mult) * mult
    while t >= mult:
        if dim % t == 0:
            return t
        t -= mult
    return dim


def _vmem_budget_bytes():
    """Generation-aware VMEM budget: ~3/4 of physical per-core VMEM,
    capped at 100 MiB (=> ~48 MiB on v7x, ~96-100 MiB on v5e/v6e)."""
    cap = 64 * 1024 * 1024
    try:
        info = pltpu.get_tpu_info()
        cap = int(getattr(info, "vmem_capacity_bytes", cap))
    except Exception:
        pass
    return int(min(cap * 3 // 4, 100 * 1024 * 1024))


def prepare_params(w, bias, mxu_dtype=jnp.bfloat16):
    """One-time parameter prep (hoisted out of the per-call path).
    torch Linear stores W as [outch, inch]; the MXU wants [inch, outch] bf16."""
    w_t = jnp.asarray(w).T.astype(mxu_dtype)              # [inch, outch]
    bias2d = jnp.asarray(bias).reshape(1, -1).astype(jnp.float32)
    return w_t, bias2d


def mlp_forward(x, w_t, bias2d, *, tile_b=512, tile_n=256, tile_k=512):
    """x: [B, inch] f32; w_t: [inch, outch] bf16 (from prepare_params);
    bias2d: [1, outch] f32."""
    B, inch = x.shape
    inch_w, outch = w_t.shape
    assert inch == inch_w, "x / W shape mismatch"

    vmem_budget = _vmem_budget_bytes()
    w_bytes = inch * outch * w_t.dtype.itemsize
    x_elt = x.dtype.itemsize

    # Keep >= 2 B-tiles when possible so both v7x TensorCores get parallel steps.
    tb_target = min(tile_b, B // 2) if B >= 16 else B
    tb = _pick_tile(B, max(tb_target, 8), 8)
    nb = max(B // tb, 1)

    def wres_footprint(tb_):
        return (2 * w_bytes                       # W (worst case double-buffered)
                + 2 * tb_ * inch * x_elt          # x tiles (double-buffered)
                + 2 * tb_ * outch * 4             # out tiles (double-buffered)
                + outch * 4)                      # bias

    use_wres = B % tb == 0 and wres_footprint(tb) <= vmem_budget

    if use_wres:
        footprint = wres_footprint(tb)
        vmem_limit = int(min(max(2 * footprint, 8 * 1024 * 1024), vmem_budget))
        cost = pl.CostEstimate(
            flops=2 * B * inch * outch,
            transcendentals=B * outch,
            bytes_accessed=B * inch * x_elt + w_bytes + outch * 4 + B * outch * 4)
        return pl.pallas_call(
            mlp_kernel_wres,
            out_shape=jax.ShapeDtypeStruct((B, outch), jnp.float32),
            grid_spec=pltpu.PrefetchScalarGridSpec(
                num_scalar_prefetch=0,
                grid=(nb,),
                in_specs=[
                    pl.BlockSpec((tb, inch), lambda i: (i, 0)),       # x tile
                    pl.BlockSpec((inch, outch), lambda i: (0, 0)),    # full W^T
                    pl.BlockSpec((1, outch), lambda i: (0, 0)),       # bias
                ],
                out_specs=pl.BlockSpec((tb, outch), lambda i: (i, 0)),
            ),
            compiler_params=pltpu.CompilerParams(
                dimension_semantics=("parallel",),
                vmem_limit_bytes=vmem_limit),
            cost_estimate=cost,
        )(x, w_t, bias2d)

    # ----- fallback: tiled 3-D grid (large shapes) -----
    tn = _pick_tile(outch, tile_n, 128)
    tk = _pick_tile(inch, tile_k, 128)

    def tiled_footprint(tb_):
        return (2 * tb_ * tk * x_elt
                + 2 * tk * tn * w_t.dtype.itemsize
                + 2 * tb_ * tn * 4
                + tn * 4)

    while (tiled_footprint(tb) > vmem_budget and tb > 8
           and (tb // 2) % 8 == 0 and B % (tb // 2) == 0):
        tb //= 2
    nb, nn, nk = B // tb, outch // tn, inch // tk

    footprint = tiled_footprint(tb)
    vmem_limit = int(min(max(2 * footprint, 8 * 1024 * 1024), vmem_budget))
    cost = pl.CostEstimate(
        flops=2 * B * inch * outch,
        transcendentals=B * outch,
        bytes_accessed=(B * inch * x_elt * nn      # x re-streamed per N-tile
                        + w_bytes * nb             # W re-streamed per B-tile
                        + outch * 4 * nb
                        + B * outch * 4))
    return pl.pallas_call(
        mlp_kernel_tiled,
        out_shape=jax.ShapeDtypeStruct((B, outch), jnp.float32),
        grid_spec=pltpu.PrefetchScalarGridSpec(
            num_scalar_prefetch=0,
            grid=(nb, nn, nk),
            in_specs=[
                pl.BlockSpec((tb, tk), lambda i, j, k: (i, k)),    # x tile
                pl.BlockSpec((tk, tn), lambda i, j, k: (k, j)),    # W^T tile
                pl.BlockSpec((1, tn), lambda i, j, k: (0, j)),     # bias tile
            ],
            out_specs=pl.BlockSpec((tb, tn), lambda i, j, k: (i, j)),
        ),
        compiler_params=pltpu.CompilerParams(
            dimension_semantics=("parallel", "parallel", "arbitrary"),
            vmem_limit_bytes=vmem_limit),
        cost_estimate=cost,
    )(x, w_t, bias2d)


def mlp_ref(x, w, bias):
    return jax.nn.gelu(x @ w.T + bias[None, :], approximate=False)


if __name__ == "__main__":
    key = jax.random.PRNGKey(0)
    # Lane-dense shapes: multiples of 8/128 so stores are unmasked, the B axis
    # yields 2 parallel grid steps (keeps both v7x TensorCores busy), and the
    # full bf16 W^T (256 KiB) stays resident in VMEM (1-D fast path).
    B, inch, outch = 256, 512, 256

    kx, kw, kb = jax.random.split(key, 3)
    x = jax.random.normal(kx, (B, inch), jnp.float32)

    # Deterministic synthetic nn.Linear parameters (torch layout [outch, inch]).
    bound = 1.0 / jnp.sqrt(jnp.float32(inch))
    w = jax.random.uniform(kw, (outch, inch), jnp.float32, -bound, bound)
    bias = jax.random.uniform(kb, (outch,), jnp.float32, -bound, bound)

    # Parameter prep paid once (not per forward call).
    w_t, bias2d = prepare_params(w, bias)

    out = jax.block_until_ready(mlp_forward(x, w_t, bias2d))

    ref = mlp_ref(x, w, bias)
    assert out.shape == (B, outch)
    # bf16 MXU operands vs. full-f32 reference -> loosened tolerance.
    assert jnp.allclose(out, ref, atol=1e-2, rtol=1e-2), "mismatch vs reference"
    print("KERNEL_OK")
</pallas_src>

<mosaic_0001>
module attributes {stable_mosaic.version = 11 : i64} {
  func.func @mlp_kernel_wres(%arg0: i32, %arg1: memref<128x512xf32, #tpu.memory_space<vmem>>, %arg2: memref<512x256xbf16, #tpu.memory_space<vmem>>, %arg3: memref<1x256xf32, #tpu.memory_space<vmem>>, %arg4: memref<128x256xf32, #tpu.memory_space<vmem>>) attributes {dimension_semantics = [#tpu.dimension_semantics<parallel>], iteration_bounds = array<i64: 2>, scalar_prefetch = 0 : i64, scratch_operands = 0 : i64, tpu.core_type = #tpu.core_type<tc>, window_params = [{transform_indices = @transform_0, window_bounds = array<i64: 128, 512>}, {pipeline_mode = #tpu.pipeline_mode<synchronous>, transform_indices = @transform_1, window_bounds = array<i64: 512, 256>}, {pipeline_mode = #tpu.pipeline_mode<synchronous>, transform_indices = @transform_2, window_bounds = array<i64: 1, 256>}, {transform_indices = @transform_3, window_bounds = array<i64: 128, 256>}]} {
    %c0 = arith.constant 0 : index
    %c0_0 = arith.constant 0 : index
    %0 = vector.load %arg1[%c0, %c0_0] : memref<128x512xf32, #tpu.memory_space<vmem>>, vector<128x512xf32>
    %1 = arith.truncf %0 : vector<128x512xf32> to vector<128x512xbf16>
    %c0_1 = arith.constant 0 : index
    %c0_2 = arith.constant 0 : index
    %2 = vector.load %arg2[%c0_1, %c0_2] : memref<512x256xbf16, #tpu.memory_space<vmem>>, vector<512x256xbf16>
    %cst = arith.constant dense<0.000000e+00> : vector<128x256xf32>
    %3 = tpu.matmul %1, %2, %cst {dimension_numbers = #tpu.dot_dimension_numbers<[1], [0], [0], [1], [0, 0, 1, 1], [], []>} : vector<128x512xbf16>, vector<512x256xbf16>, vector<128x256xf32> -> vector<128x256xf32>
    %c0_3 = arith.constant 0 : index
    %c0_4 = arith.constant 0 : index
    %4 = vector.load %arg3[%c0_3, %c0_4] : memref<1x256xf32, #tpu.memory_space<vmem>>, vector<1x256xf32>
    %5 = vector.broadcast %4 : vector<1x256xf32> to vector<128x256xf32>
    %6 = arith.addf %3, %5 : vector<128x256xf32>
    %cst_5 = arith.constant 5.000000e-01 : f32
    %7 = vector.broadcast %cst_5 : f32 to vector<128x256xf32>
    %8 = arith.mulf %7, %6 : vector<128x256xf32>
    %cst_6 = arith.constant 0.707106769 : f32
    %9 = vector.broadcast %cst_6 : f32 to vector<128x256xf32>
    %10 = arith.mulf %6, %9 : vector<128x256xf32>
    %11 = math.erf %10 : vector<128x256xf32>
    %cst_7 = arith.constant 1.000000e+00 : f32
    %12 = vector.broadcast %cst_7 : f32 to vector<128x256xf32>
    %13 = arith.addf %12, %11 : vector<128x256xf32>
    %14 = arith.mulf %8, %13 : vector<128x256xf32>
    %c0_8 = arith.constant 0 : index
    %c0_9 = arith.constant 0 : index
    %15 = vector.load %arg4[%c0_8, %c0_9] : memref<128x256xf32, #tpu.memory_space<vmem>>, vector<128x256xf32>
    tpu.vector_store %arg4[%c0_8, %c0_9], %14 {strides = array<i32>} : memref<128x256xf32, #tpu.memory_space<vmem>>, vector<128x256xf32>,
    return
  }
  func.func @transform_0(%arg0: i32) -> (i32, i32) {
    %c0_i32 = arith.constant 0 : i32
    %c0_i32_0 = arith.constant 0 : i32
    return %arg0, %c0_i32 : i32, i32
  }
  func.func @transform_1(%arg0: i32) -> (i32, i32) {
    %c0_i32 = arith.constant 0 : i32
    %c0_i32_0 = arith.constant 0 : i32
    %c0_i32_1 = arith.constant 0 : i32
    return %c0_i32, %c0_i32_0 : i32, i32
  }
  func.func @transform_2(%arg0: i32) -> (i32, i32) {
    %c0_i32 = arith.constant 0 : i32
    %c0_i32_0 = arith.constant 0 : i32
    %c0_i32_1 = arith.constant 0 : i32
    return %c0_i32, %c0_i32_0 : i32, i32
  }
  func.func @transform_3(%arg0: i32) -> (i32, i32) {
    %c0_i32 = arith.constant 0 : i32
    %c0_i32_0 = arith.constant 0 : i32
    return %arg0, %c0_i32 : i32, i32
  }
}

</mosaic_0001>

<llo_original>
// kernel: tpu_custom_call.1
$region0: #{tpu_custom_call.1}
  #allocation0 [shape = 'u32[]', space=smem, size = 0x4, offset = 0x4, fixed_abs, tag = 'smem constant byte address 0x4 - core index']
  #allocation1 [shape = 'u32[72,128]{1,0:T(1,128)}', space=vmem, size = 0x9000, scoped, tag = 'internal scratch']
  %s0 = inlined_call_operand.hbm [shape: f32[256,512], index: 0, kind: input, shape index: {}]
  %s1 = inlined_call_operand.hbm [shape: bf16[512,256], index: 1, kind: input, shape index: {}]
  %s2 = inlined_call_operand.hbm [shape: f32[1,256], index: 2, kind: input, shape index: {}]
  %s3 = inlined_call_operand.hbm [shape: f32[256,256], index: 3, kind: output, shape index: {}]
  %s4 = sld [smem:[#allocation0]]
  $region57: #{tpu_custom_call.1} parent=0
    _
  %s6 = ssub.s32 1, %s4
  %s7 = scalar_select 0, %s6, %s4
  $region1: #{tpu_custom_call.1} parent=0
    #allocation2 [shape = 'u8[524288]{0}', space=vmem, size = 0x80000, scoped, tag = 'input window, operand 0']
    #allocation3 [shape = 's32[2]{0}', space=sflag, size = 0x8, scoped, tag = 'scoped memory for tpu_custom_call.1']
    #allocation4 [shape = 's32[2]{0}', space=sflag, size = 0x8, scoped, tag = 'scoped memory for tpu_custom_call.1']
    #allocation5 [shape = 'u8[262144]{0}', space=vmem, size = 0x40000, scoped, tag = 'input window, operand 1, single buffered']
    #allocation6 [shape = 's32[1]{0}', space=sflag, size = 0x4, scoped, tag = 'scoped memory for tpu_custom_call.1']
    #allocation7 [shape = 'u8[1024]{0}', space=vmem, size = 0x400, scoped, tag = 'input window, operand 2, single buffered']
    #allocation8 [shape = 'u8[262144]{0}', space=vmem, size = 0x40000, scoped, tag = 'output window, operand 0']
    %8 = vsyncpa [#allocation3], 0
    %s9 = scalar_lea.sflag [#allocation3], 1
    %10 = vsyncpa %s9, 0
    %11 = vsyncpa [#allocation6], 0
    %12 = vsyncpa [#allocation4], 0
    %s13 = scalar_lea.sflag [#allocation4], 1
    %14 = vsyncpa %s13, 0
    loop: start=0, step=1, limit=4
    $region2: #{tpu_custom_call.1} parent=1 // loop_pre_header
      _
    $region3: #{tpu_custom_call.1} parent=1 // loop_header
      %s16 = sphi 0, %s20
      %p17 = scmp.ge.s32.totalorder %s16, 4
      %s26 = sphi 0, %s28
      %s29 = sphi 0, %s26
      %s30 = sphi 0, %s29
      %s46 = sphi 0, %s30
      %s50 = sphi 0, %s50
      %s52 = sphi 0, %s50
      %s53 = sphi 0, %s52
      %s67 = sphi 0, %s53
      %s71 = sphi 0, %s71
      %s73 = sphi 0, %s71
      %s74 = sphi 0, %s73
      %s88 = sphi 0, %s74
      %s94 = sphi 0, %s96
      %s97 = sphi 0, %s94
      %s98 = sphi 0, %s97
      %s114 = sphi 0, %s98
    $region4: #{tpu_custom_call.1} parent=1 // loop_header_branch
      %19 = sbr.rel (%p17) target = $region8
    $region5: #{tpu_custom_call.1} parent=1 // loop_body
      %s21 = ssub.s32 %s16, 1
      %s22 = ssub.s32 %s16, 2
      %s23 = sadd.s32 %s16, 1
      %s24 = ssub.s32 %s16, %s23
      %p25 = scmp.eq.s32.totalorder %s24, 0
      %s27 = sadd.s32 %s26, 1
      %s28 = scalar_select %p25, %s26, %s27
      %p31 = pneg %p25
      %p32 = scmp.eq.s32.totalorder %s16, 1
      %p33 = por %p31, %p32
      %p34 = scmp.ne.s32.totalorder %s26, %s29
      %p35 = scmp.eq.s32.totalorder %s16, 0
      %p36 = por %p34, %p35
      %p37 = scmp.ne.s32.totalorder %s26, %s29
      %p38 = scmp.eq.s32.totalorder %s21, 1
      %p39 = por %p37, %p38
      %p40 = scmp.ne.s32.totalorder %s29, %s30
      %p41 = scmp.eq.s32.totalorder %s21, 0
      %p42 = por %p40, %p41
      %p43 = scmp.ne.s32.totalorder %s29, %s30
      %p44 = scmp.eq.s32.totalorder %s22, 1
      %p45 = por %p43, %p44
      %p47 = scmp.ne.s32.totalorder %s30, %s46
      %p48 = scmp.eq.s32.totalorder %s22, 0
      %p49 = por %p47, %p48
      %s51 = sadd.s32 %s50, 1
      %p54 = scmp.eq.s32.totalorder %s16, 1
      %p55 = scmp.ne.s32.totalorder %s50, %s52
      %p56 = scmp.eq.s32.totalorder %s16, 0
      %p57 = por %p55, %p56
      %p58 = scmp.ne.s32.totalorder %s50, %s52
      %p59 = scmp.eq.s32.totalorder %s21, 1
      %p60 = por %p58, %p59
      %p61 = scmp.ne.s32.totalorder %s52, %s53
      %p62 = scmp.eq.s32.totalorder %s21, 0
      %p63 = por %p61, %p62
      %p64 = scmp.ne.s32.totalorder %s52, %s53
      %p65 = scmp.eq.s32.totalorder %s22, 1
      %p66 = por %p64, %p65
      %p68 = scmp.ne.s32.totalorder %s53, %s67
      %p69 = scmp.eq.s32.totalorder %s22, 0
      %p70 = por %p68, %p69
      %s72 = sadd.s32 %s71, 1
      %p75 = scmp.eq.s32.totalorder %s16, 1
      %p76 = scmp.ne.s32.totalorder %s71, %s73
      %p77 = scmp.eq.s32.totalorder %s16, 0
      %p78 = por %p76, %p77
      %p79 = scmp.ne.s32.totalorder %s71, %s73
      %p80 = scmp.eq.s32.totalorder %s21, 1
      %p81 = por %p79, %p80
      %p82 = scmp.ne.s32.totalorder %s73, %s74
      %p83 = scmp.eq.s32.totalorder %s21, 0
      %p84 = por %p82, %p83
      %p85 = scmp.ne.s32.totalorder %s73, %s74
      %p86 = scmp.eq.s32.totalorder %s22, 1
      %p87 = por %p85, %p86
      %p89 = scmp.ne.s32.totalorder %s74, %s88
      %p90 = scmp.eq.s32.totalorder %s22, 0
      %p91 = por %p89, %p90
      %s92 = ssub.s32 %s16, %s23
      %p93 = scmp.eq.s32.totalorder %s92, 0
      %s95 = sadd.s32 %s94, 1
      %s96 = scalar_select %p93, %s94, %s95
      %p99 = pneg %p93
      %p100 = scmp.eq.s32.totalorder %s16, 1
      %p101 = por %p99, %p100
      %p102 = scmp.ne.s32.totalorder %s94, %s97
      %p103 = scmp.eq.s32.totalorder %s16, 0
      %p104 = por %p102, %p103
      %p105 = scmp.ne.s32.totalorder %s94, %s97
      %p106 = scmp.eq.s32.totalorder %s21, 1
      %p107 = por %p105, %p106
      %p108 = scmp.ne.s32.totalorder %s97, %s98
      %p109 = scmp.eq.s32.totalorder %s21, 0
      %p110 = por %p108, %p109
      %p111 = scmp.ne.s32.totalorder %s97, %s98
      %p112 = scmp.eq.s32.totalorder %s22, 1
      %p113 = por %p111, %p112
      %p115 = scmp.ne.s32.totalorder %s98, %s114
      %p116 = scmp.eq.s32.totalorder %s22, 0
      %p117 = por %p115, %p116
      %p118 = scmp.le.s32.totalorder 1, %s16
      %p119 = scmp.lt.s32.totalorder %s16, 3
      %p120 = pnand %p118, %p119
      %p121 = pneg %p120
      // Predicated region
      $region9: #{tpu_custom_call.1} parent=5 // pred_check
        _
      $region10: #{tpu_custom_call.1} parent=5 // pred_check_branch
        %123 = sbr.rel (%p120) target = $region12
      $region11: #{tpu_custom_call.1} parent=5 // pred_region
        %s124 = ssub.s32 %s16, 1
        // Predicated region
        $region13: #{tpu_custom_call.1} parent=11 // pred_check
          %p125 = pneg %p63
        $region14: #{tpu_custom_call.1} parent=11 // pred_check_branch
          %127 = sbr.rel (%p125) target = $region16
        $region15: #{tpu_custom_call.1} parent=11 // pred_region
          %129 = vsyncadd [#allocation6], 0
          %s130 = sshll.u32 %s1, 4
          %s131 = int_to_ptr.hbm [resolvable:$true] %s130
          %s132 = sshll.u32 [#allocation5], 4
          %s133 = int_to_ptr.vmem [resolvable:$true] %s132
          %138 = dma.hbm_to_vmem [thread:$0]  %s131, 8192, %s133, [#allocation6], 128, 128, 8
        $region16: #{tpu_custom_call.1} parent=11 // pred_fallthru
          _
        // Predicated region
        $region17: #{tpu_custom_call.1} parent=11 // pred_check
          %p139 = pneg %p84
        $region18: #{tpu_custom_call.1} parent=11 // pred_check_branch
          %141 = sbr.rel (%p139) target = $region20
        $region19: #{tpu_custom_call.1} parent=11 // pred_region
          %143 = vsyncadd [#allocation6], 0
          %s145 = sshll.u32 %s2, 4
          %s146 = int_to_ptr.hbm [resolvable:$true] %s145
          %s147 = sshll.u32 [#allocation7], 4
          %s148 = int_to_ptr.vmem [resolvable:$true] %s147
          %150 = dma.hbm_to_vmem [thread:$0]  %s146, 32, %s148, [#allocation6]
        $region20: #{tpu_custom_call.1} parent=11 // pred_fallthru
          _
      $region12: #{tpu_custom_call.1} parent=5 // pred_fallthru
        _
      %p151 = scmp.lt.s32.totalorder %s16, 2
      // Predicated region
      $region21: #{tpu_custom_call.1} parent=5 // pred_check
        %p152 = pneg %p151
      $region22: #{tpu_custom_call.1} parent=5 // pred_check_branch
        %154 = sbr.rel (%p152) target = $region24
      $region23: #{tpu_custom_call.1} parent=5 // pred_region
        // Predicated region
        $region25: #{tpu_custom_call.1} parent=23 // pred_check
          %p155 = pneg %p36
        $region26: #{tpu_custom_call.1} parent=23 // pred_check_branch
          %157 = sbr.rel (%p155) target = $region28
        $region27: #{tpu_custom_call.1} parent=23 // pred_region
          %s158 = sand.u32 %s26, 1
          %s159 = scalar_lea.sflag [#allocation3], %s158
          %s160 = sand.u32 %s26, 1
          %s161 = smul.addr %s160, 512
          %s162 = scalar_lea.vmem [#allocation2], %s161
          %s163 = smul.u32 16, %s16
          %165 = vsyncadd %s159, 0
          %s166 = smul.addr %s163, 4
          %s167 = smul.addr %s166, 8
          %s168 = scalar_lea.hbm %s0, %s167
          %s169 = sshll.u32 %s168, 4
          %s170 = int_to_ptr.hbm [resolvable:$true] %s169
          %s171 = sshll.u32 %s162, 4
          %s172 = int_to_ptr.vmem [resolvable:$true] %s171
          %177 = dma.hbm_to_vmem [thread:$0]  %s170, 8192, %s172, %s159, 512, 512, 32
        $region28: #{tpu_custom_call.1} parent=23 // pred_fallthru
          _
      $region24: #{tpu_custom_call.1} parent=5 // pred_fallthru
        _
      %p178 = scmp.le.s32.totalorder 1, %s16
      %p179 = scmp.lt.s32.totalorder %s16, 3
      %p180 = pnand %p178, %p179
      %p181 = pneg %p180
      // Predicated region
      $region29: #{tpu_custom_call.1} parent=5 // pred_check
        _
      $region30: #{tpu_custom_call.1} parent=5 // pred_check_branch
        %183 = sbr.rel (%p180) target = $region32
      $region31: #{tpu_custom_call.1} parent=5 // pred_region
        %s184 = ssub.s32 %s16, 1
        %s185 = sand.u32 %s29, 1
        %s186 = scalar_lea.sflag [#allocation3], %s185
        %s187 = sand.u32 %s29, 1
        %s188 = smul.addr %s187, 512
        %s189 = scalar_lea.vmem [#allocation2], %s188
        // Predicated region
        $region33: #{tpu_custom_call.1} parent=31 // pred_check
          %p190 = pneg %p42
        $region34: #{tpu_custom_call.1} parent=31 // pred_check_branch
          %192 = sbr.rel (%p190) target = $region36
        $region35: #{tpu_custom_call.1} parent=31 // pred_region
          %194 = dma.done %s186, 8192
        $region36: #{tpu_custom_call.1} parent=31 // pred_fallthru
          _
        // Predicated region
        $region37: #{tpu_custom_call.1} parent=31 // pred_check
          %p195 = pneg %p63
        $region38: #{tpu_custom_call.1} parent=31 // pred_check_branch
          %197 = sbr.rel (%p195) target = $region40
        $region39: #{tpu_custom_call.1} parent=31 // pred_region
          %199 = dma.done [#allocation6], 8192
        $region40: #{tpu_custom_call.1} parent=31 // pred_fallthru
          _
        // Predicated region
        $region41: #{tpu_custom_call.1} parent=31 // pred_check
          %p200 = pneg %p84
        $region42: #{tpu_custom_call.1} parent=31 // pred_check_branch
          %202 = sbr.rel (%p200) target = $region44
        $region43: #{tpu_custom_call.1} parent=31 // pred_region
          %204 = dma.done [#allocation6], 32
        $region44: #{tpu_custom_call.1} parent=31 // pred_fallthru
          _
        %s205 = sand.u32 %s29, 1
        %s206 = scalar_lea.sflag [#allocation3], %s205
        %s207 = sand.u32 %s29, 1
        %s208 = smul.addr %s207, 512
        %s209 = scalar_lea.vmem [#allocation2], %s208
        %p210 = pneg %p42
        %p211 = pneg %p39
        %p212 = pneg %p63
        %p213 = pneg %p60
        %p214 = pneg %p84
        %p215 = pneg %p81
        %p216 = pneg %p110
        %p217 = pneg %p107
        %s218 = sand.u32 %s97, 1
        %s219 = scalar_lea.sflag [#allocation4], %s218
        %s220 = sand.u32 %s97, 1
        %s221 = smul.addr %s220, 256
        %s222 = scalar_lea.vmem [#allocation8], %s221
        %s223 = smul.u32 16, %s21
        %s224 = smul.u32 16, %s21
        %v225 = vld [vmem:[%s189] sm:$0xff]
        %v226 = vld [vmem:[%s189 + $0x8] sm:$0xff]
        %v227 = vld [vmem:[%s189 + $0x10] sm:$0xff]
        %v228 = vld [vmem:[%s189 + $0x18] sm:$0xff]
        %v229 = vld [vmem:[%s189 + $0x20] sm:$0xff]
        %v230 = vld [vmem:[%s189 + $0x28] sm:$0xff]
        %v231 = vld [vmem:[%s189 + $0x30] sm:$0xff]
        %v232 = vld [vmem:[%s189 + $0x38] sm:$0xff]
        %v233 = vld [vmem:[%s189 + $0x40] sm:$0xff]
        %v234 = vld [vmem:[%s189 + $0x48] sm:$0xff]
        %v235 = vld [vmem:[%s189 + $0x50] sm:$0xff]
        %v236 = vld [vmem:[%s189 + $0x58] sm:$0xff]
        %v237 = vld [vmem:[%s189 + $0x60] sm:$0xff]
        %v238 = vld [vmem:[%s189 + $0x68] sm:$0xff]
        %v239 = vld [vmem:[%s189 + $0x70] sm:$0xff]
        %v240 = vld [vmem:[%s189 + $0x78] sm:$0xff]
        %v241 = vld [vmem:[%s189 + $0x80] sm:$0xff]
        %v242 = vld [vmem:[%s189 + $0x88] sm:$0xff]
        %v243 = vld [vmem:[%s189 + $0x90] sm:$0xff]
        %v244 = vld [vmem:[%s189 + $0x98] sm:$0xff]
        %v245 = vld [vmem:[%s189 + $0xa0] sm:$0xff]
        %v246 = vld [vmem:[%s189 + $0xa8] sm:$0xff]
        %v247 = vld [vmem:[%s189 + $0xb0] sm:$0xff]
        %v248 = vld [vmem:[%s189 + $0xb8] sm:$0xff]
        %v249 = vld [vmem:[%s189 + $0xc0] sm:$0xff]
        %v250 = vld [vmem:[%s189 + $0xc8] sm:$0xff]
        %v251 = vld [vmem:[%s189 + $0xd0] sm:$0xff]
        %v252 = vld [vmem:[%s189 + $0xd8] sm:$0xff]
        %v253 = vld [vmem:[%s189 + $0xe0] sm:$0xff]
        %v254 = vld [vmem:[%s189 + $0xe8] sm:$0xff]
        %v255 = vld [vmem:[%s189 + $0xf0] sm:$0xff]
        %v256 = vld [vmem:[%s189 + $0xf8] sm:$0xff]
        %v257 = vld [vmem:[%s189 + $0x100] sm:$0xff]
        %v258 = vld [vmem:[%s189 + $0x108] sm:$0xff]
        %v259 = vld [vmem:[%s189 + $0x110] sm:$0xff]
        %v260 = vld [vmem:[%s189 + $0x118] sm:$0xff]
        %v261 = vld [vmem:[%s189 + $0x120] sm:$0xff]
        %v262 = vld [vmem:[%s189 + $0x128] sm:$0xff]
        %v263 = vld [vmem:[%s189 + $0x130] sm:$0xff]
        %v264 = vld [vmem:[%s189 + $0x138] sm:$0xff]
        %v265 = vld [vmem:[%s189 + $0x140] sm:$0xff]
        %v266 = vld [vmem:[%s189 + $0x148] sm:$0xff]
        %v267 = vld [vmem:[%s189 + $0x150] sm:$0xff]
        %v268 = vld [vmem:[%s189 + $0x158] sm:$0xff]
        %v269 = vld [vmem:[%s189 + $0x160] sm:$0xff]
        %v270 = vld [vmem:[%s189 + $0x168] sm:$0xff]
        %v271 = vld [vmem:[%s189 + $0x170] sm:$0xff]
        %v272 = vld [vmem:[%s189 + $0x178] sm:$0xff]
        %v273 = vld [vmem:[%s189 + $0x180] sm:$0xff]
        %v274 = vld [vmem:[%s189 + $0x188] sm:$0xff]
        %v275 = vld [vmem:[%s189 + $0x190] sm:$0xff]
        %v276 = vld [vmem:[%s189 + $0x198] sm:$0xff]
        %v277 = vld [vmem:[%s189 + $0x1a0] sm:$0xff]
        %v278 = vld [vmem:[%s189 + $0x1a8] sm:$0xff]
        %v279 = vld [vmem:[%s189 + $0x1b0] sm:$0xff]
        %v280 = vld [vmem:[%s189 + $0x1b8] sm:$0xff]
        %v281 = vld [vmem:[%s189 + $0x1c0] sm:$0xff]
        %v282 = vld [vmem:[%s189 + $0x1c8] sm:$0xff]
        %v283 = vld [vmem:[%s189 + $0x1d0] sm:$0xff]
        %v284 = vld [vmem:[%s189 + $0x1d8] sm:$0xff]
        %v285 = vld [vmem:[%s189 + $0x1e0] sm:$0xff]
        %v286 = vld [vmem:[%s189 + $0x1e8] sm:$0xff]
        %v287 = vld [vmem:[%s189 + $0x1f0] sm:$0xff]
        %v288 = vld [vmem:[%s189 + $0x1f8] sm:$0xff]
        %v289 = vpack.c.bf16 %v229, %v225
        %v290 = vpack.c.bf16 %v230, %v226
        %v291 = vpack.c.bf16 %v231, %v227
        %v292 = vpack.c.bf16 %v232, %v228
        %v293 = vpack.c.bf16 %v237, %v233
        %v294 = vpack.c.bf16 %v238, %v234
        %v295 = vpack.c.bf16 %v239, %v235
        %v296 = vpack.c.bf16 %v240, %v236
        %v297 = vpack.c.bf16 %v245, %v241
        %v298 = vpack.c.bf16 %v246, %v242
        %v299 = vpack.c.bf16 %v247, %v243
        %v300 = vpack.c.bf16 %v248, %v244
        %v301 = vpack.c.bf16 %v253, %v249
        %v302 = vpack.c.bf16 %v254, %v250
        %v303 = vpack.c.bf16 %v255, %v251
        %v304 = vpack.c.bf16 %v256, %v252
        %v305 = vpack.c.bf16 %v261, %v257
        %v306 = vpack.c.bf16 %v262, %v258
        %v307 = vpack.c.bf16 %v263, %v259
        %v308 = vpack.c.bf16 %v264, %v260
        %v309 = vpack.c.bf16 %v269, %v265
        %v310 = vpack.c.bf16 %v270, %v266
        %v311 = vpack.c.bf16 %v271, %v267
        %v312 = vpack.c.bf16 %v272, %v268
        %v313 = vpack.c.bf16 %v277, %v273
        %v314 = vpack.c.bf16 %v278, %v274
        %v315 = vpack.c.bf16 %v279, %v275
        %v316 = vpack.c.bf16 %v280, %v276
        %v317 = vpack.c.bf16 %v285, %v281
        %v318 = vpack.c.bf16 %v286, %v282
        %v319 = vpack.c.bf16 %v287, %v283
        %v320 = vpack.c.bf16 %v288, %v284
        %v321 = vld [vmem:[#allocation5] sm:$0xff]
        %v322 = vld [vmem:[#allocation5 + $0x8] sm:$0xff]
        %v323 = vld [vmem:[#allocation5 + $0x10] sm:$0xff]
        %v324 = vld [vmem:[#allocation5 + $0x18] sm:$0xff]
        %v325 = vld [vmem:[#allocation5 + $0x20] sm:$0xff]
        %v326 = vld [vmem:[#allocation5 + $0x28] sm:$0xff]
        %v327 = vld [vmem:[#allocation5 + $0x30] sm:$0xff]
        %v328 = vld [vmem:[#allocation5 + $0x38] sm:$0xff]
        %v329 = vld [vmem:[#allocation5 + $0x40] sm:$0xff]
        %v330 = vld [vmem:[#allocation5 + $0x48] sm:$0xff]
        %v331 = vld [vmem:[#allocation5 + $0x50] sm:$0xff]
        %v332 = vld [vmem:[#allocation5 + $0x58] sm:$0xff]
        %v333 = vld [vmem:[#allocation5 + $0x60] sm:$0xff]
        %v334 = vld [vmem:[#allocation5 + $0x68] sm:$0xff]
        %v335 = vld [vmem:[#allocation5 + $0x70] sm:$0xff]
        %v336 = vld [vmem:[#allocation5 + $0x78] sm:$0xff]
        %v337 = vld [vmem:[#allocation5 + $0x80] sm:$0xff]
        %v338 = vld [vmem:[#allocation5 + $0x88] sm:$0xff]
        %v339 = vld [vmem:[#allocation5 + $0x90] sm:$0xff]
        %v340 = vld [vmem:[#allocation5 + $0x98] sm:$0xff]
        %v341 = vld [vmem:[#allocation5 + $0xa0] sm:$0xff]
        %v342 = vld [vmem:[#allocation5 + $0xa8] sm:$0xff]
        %v343 = vld [vmem:[#allocation5 + $0xb0] sm:$0xff]
        %v344 = vld [vmem:[#allocation5 + $0xb8] sm:$0xff]
        %v345 = vld [vmem:[#allocation5 + $0xc0] sm:$0xff]
        %v346 = vld [vmem:[#allocation5 + $0xc8] sm:$0xff]
        %v347 = vld [vmem:[#allocation5 + $0xd0] sm:$0xff]
        %v348 = vld [vmem:[#allocation5 + $0xd8] sm:$0xff]
        %v349 = vld [vmem:[#allocation5 + $0xe0] sm:$0xff]
        %v350 = vld [vmem:[#allocation5 + $0xe8] sm:$0xff]
        %v351 = vld [vmem:[#allocation5 + $0xf0] sm:$0xff]
        %v352 = vld [vmem:[#allocation5 + $0xf8] sm:$0xff]
        %v353 = vld [vmem:[#allocation5 + $0x100] sm:$0xff]
        %v354 = vld [vmem:[#allocation5 + $0x108] sm:$0xff]
        %v355 = vld [vmem:[#allocation5 + $0x110] sm:$0xff]
        %v356 = vld [vmem:[#allocation5 + $0x118] sm:$0xff]
        %v357 = vld [vmem:[#allocation5 + $0x120] sm:$0xff]
        %v358 = vld [vmem:[#allocation5 + $0x128] sm:$0xff]
        %v359 = vld [vmem:[#allocation5 + $0x130] sm:$0xff]
        %v360 = vld [vmem:[#allocation5 + $0x138] sm:$0xff]
        %v361 = vld [vmem:[#allocation5 + $0x140] sm:$0xff]
        %v362 = vld [vmem:[#allocation5 + $0x148] sm:$0xff]
        %v363 = vld [vmem:[#allocation5 + $0x150] sm:$0xff]
        %v364 = vld [vmem:[#allocation5 + $0x158] sm:$0xff]
        %v365 = vld [vmem:[#allocation5 + $0x160] sm:$0xff]
        %v366 = vld [vmem:[#allocation5 + $0x168] sm:$0xff]
        %v367 = vld [vmem:[#allocation5 + $0x170] sm:$0xff]
        %v368 = vld [vmem:[#allocation5 + $0x178] sm:$0xff]
        %v369 = vld [vmem:[#allocation5 + $0x180] sm:$0xff]
        %v370 = vld [vmem:[#allocation5 + $0x188] sm:$0xff]
        %v371 = vld [vmem:[#allocation5 + $0x190] sm:$0xff]
        %v372 = vld [vmem:[#allocation5 + $0x198] sm:$0xff]
        %v373 = vld [vmem:[#allocation5 + $0x1a0] sm:$0xff]
        %v374 = vld [vmem:[#allocation5 + $0x1a8] sm:$0xff]
        %v375 = vld [vmem:[#allocation5 + $0x1b0] sm:$0xff]
        %v376 = vld [vmem:[#allocation5 + $0x1b8] sm:$0xff]
        %v377 = vld [vmem:[#allocation5 + $0x1c0] sm:$0xff]
        %v378 = vld [vmem:[#allocation5 + $0x1c8] sm:$0xff]
        %v379 = vld [vmem:[#allocation5 + $0x1d0] sm:$0xff]
        %v380 = vld [vmem:[#allocation5 + $0x1d8] sm:$0xff]
        %v381 = vld [vmem:[#allocation5 + $0x1e0] sm:$0xff]
        %v382 = vld [vmem:[#allocation5 + $0x1e8] sm:$0xff]
        %v383 = vld [vmem:[#allocation5 + $0x1f0] sm:$0xff]
        %v384 = vld [vmem:[#allocation5 + $0x1f8] sm:$0xff]
        %v385 = vld [vmem:[#allocation7] sm:$0x3]
        %v387 = vperm.slane %v385, 0
        %v388 = vperm.slane %v385, 1
        %v455 = vunpack.c.l.b16 %v321
        %v456 = vunpack.c.h.b16 %v321
        %v457 = vunpack.c.l.b16 %v322
        %v458 = vunpack.c.h.b16 %v322
        %v459 = vunpack.c.l.b16 %v323
        %v460 = vunpack.c.h.b16 %v323
        %v461 = vunpack.c.l.b16 %v324
        %v462 = vunpack.c.h.b16 %v324
        %v463 = vunpack.c.l.b16 %v325
        %v464 = vunpack.c.h.b16 %v325
        %v465 = vunpack.c.l.b16 %v326
        %v466 = vunpack.c.h.b16 %v326
        %v467 = vunpack.c.l.b16 %v327
        %v468 = vunpack.c.h.b16 %v327
        %v469 = vunpack.c.l.b16 %v328
        %v470 = vunpack.c.h.b16 %v328
        %v471 = vunpack.c.l.b16 %v329
        %v472 = vunpack.c.h.b16 %v329
        %v473 = vunpack.c.l.b16 %v330
        %v474 = vunpack.c.h.b16 %v330
        %v475 = vunpack.c.l.b16 %v331
        %v476 = vunpack.c.h.b16 %v331
        %v477 = vunpack.c.l.b16 %v332
        %v478 = vunpack.c.h.b16 %v332
        %v479 = vunpack.c.l.b16 %v333
        %v480 = vunpack.c.h.b16 %v333
        %v481 = vunpack.c.l.b16 %v334
        %v482 = vunpack.c.h.b16 %v334
        %v483 = vunpack.c.l.b16 %v335
        %v484 = vunpack.c.h.b16 %v335
        %v485 = vunpack.c.l.b16 %v336
        %v486 = vunpack.c.h.b16 %v336
        %v487 = vunpack.c.l.b16 %v337
        %v488 = vunpack.c.h.b16 %v337
        %v489 = vunpack.c.l.b16 %v338
        %v490 = vunpack.c.h.b16 %v338
        %v491 = vunpack.c.l.b16 %v339
        %v492 = vunpack.c.h.b16 %v339
        %v493 = vunpack.c.l.b16 %v340
        %v494 = vunpack.c.h.b16 %v340
        %v495 = vunpack.c.l.b16 %v341
        %v496 = vunpack.c.h.b16 %v341
        %v497 = vunpack.c.l.b16 %v342
        %v498 = vunpack.c.h.b16 %v342
        %v499 = vunpack.c.l.b16 %v343
        %v500 = vunpack.c.h.b16 %v343
        %v501 = vunpack.c.l.b16 %v344
        %v502 = vunpack.c.h.b16 %v344
        %v503 = vunpack.c.l.b16 %v345
        %v504 = vunpack.c.h.b16 %v345
        %v505 = vunpack.c.l.b16 %v346
        %v506 = vunpack.c.h.b16 %v346
        %v507 = vunpack.c.l.b16 %v347
        %v508 = vunpack.c.h.b16 %v347
        %v509 = vunpack.c.l.b16 %v348
        %v510 = vunpack.c.h.b16 %v348
        %v511 = vunpack.c.l.b16 %v349
        %v512 = vunpack.c.h.b16 %v349
        %v513 = vunpack.c.l.b16 %v350
        %v514 = vunpack.c.h.b16 %v350
        %v515 = vunpack.c.l.b16 %v351
        %v516 = vunpack.c.h.b16 %v351
        %v517 = vunpack.c.l.b16 %v352
        %v518 = vunpack.c.h.b16 %v352
        %v519 = vunpack.c.l.b16 %v353
        %v520 = vunpack.c.h.b16 %v353
        %v521 = vunpack.c.l.b16 %v354
        %v522 = vunpack.c.h.b16 %v354
        %v523 = vunpack.c.l.b16 %v355
        %v524 = vunpack.c.h.b16 %v355
        %v525 = vunpack.c.l.b16 %v356
        %v526 = vunpack.c.h.b16 %v356
        %v527 = vunpack.c.l.b16 %v357
        %v528 = vunpack.c.h.b16 %v357
        %v529 = vunpack.c.l.b16 %v358
        %v530 = vunpack.c.h.b16 %v358
        %v531 = vunpack.c.l.b16 %v359
        %v532 = vunpack.c.h.b16 %v359
        %v533 = vunpack.c.l.b16 %v360
        %v534 = vunpack.c.h.b16 %v360
        %v535 = vunpack.c.l.b16 %v361
        %v536 = vunpack.c.h.b16 %v361
        %v537 = vunpack.c.l.b16 %v362
        %v538 = vunpack.c.h.b16 %v362
        %v539 = vunpack.c.l.b16 %v363
        %v540 = vunpack.c.h.b16 %v363
        %v541 = vunpack.c.l.b16 %v364
        %v542 = vunpack.c.h.b16 %v364
        %v543 = vunpack.c.l.b16 %v365
        %v544 = vunpack.c.h.b16 %v365
        %v545 = vunpack.c.l.b16 %v366
        %v546 = vunpack.c.h.b16 %v366
        %v547 = vunpack.c.l.b16 %v367
        %v548 = vunpack.c.h.b16 %v367
        %v549 = vunpack.c.l.b16 %v368
        %v550 = vunpack.c.h.b16 %v368
        %v551 = vunpack.c.l.b16 %v369
        %v552 = vunpack.c.h.b16 %v369
        %v553 = vunpack.c.l.b16 %v370
        %v554 = vunpack.c.h.b16 %v370
        %v555 = vunpack.c.l.b16 %v371
        %v556 = vunpack.c.h.b16 %v371
        %v557 = vunpack.c.l.b16 %v372
        %v558 = vunpack.c.h.b16 %v372
        %v559 = vunpack.c.l.b16 %v373
        %v560 = vunpack.c.h.b16 %v373
        %v561 = vunpack.c.l.b16 %v374
        %v562 = vunpack.c.h.b16 %v374
        %v563 = vunpack.c.l.b16 %v375
        %v564 = vunpack.c.h.b16 %v375
        %v565 = vunpack.c.l.b16 %v376
        %v566 = vunpack.c.h.b16 %v376
        %v567 = vunpack.c.l.b16 %v377
        %v568 = vunpack.c.h.b16 %v377
        %v569 = vunpack.c.l.b16 %v378
        %v570 = vunpack.c.h.b16 %v378
        %v571 = vunpack.c.l.b16 %v379
        %v572 = vunpack.c.h.b16 %v379
        %v573 = vunpack.c.l.b16 %v380
        %v574 = vunpack.c.h.b16 %v380
        %v575 = vunpack.c.l.b16 %v381
        %v576 = vunpack.c.h.b16 %v381
        %v577 = vunpack.c.l.b16 %v382
        %v578 = vunpack.c.h.b16 %v382
        %v579 = vunpack.c.l.b16 %v383
        %v580 = vunpack.c.h.b16 %v383
        %v581 = vunpack.c.l.b16 %v384
        %v582 = vunpack.c.h.b16 %v384
        %v583 = vpack.c.b16 %v457, %v455
        %v584 = vpack.c.b16 %v458, %v456
        %v585 = vpack.c.b16 %v461, %v459
        %v586 = vpack.c.b16 %v462, %v460
        %v587 = vpack.c.b16 %v465, %v463
        %v588 = vpack.c.b16 %v466, %v464
        %v589 = vpack.c.b16 %v469, %v467
        %v590 = vpack.c.b16 %v470, %v468
        %v591 = vpack.c.b16 %v473, %v471
        %v592 = vpack.c.b16 %v474, %v472
        %v593 = vpack.c.b16 %v477, %v475
        %v594 = vpack.c.b16 %v478, %v476
        %v595 = vpack.c.b16 %v481, %v479
        %v596 = vpack.c.b16 %v482, %v480
        %v597 = vpack.c.b16 %v485, %v483
        %v598 = vpack.c.b16 %v486, %v484
        %v599 = vpack.c.b16 %v489, %v487
        %v600 = vpack.c.b16 %v490, %v488
        %v601 = vpack.c.b16 %v493, %v491
        %v602 = vpack.c.b16 %v494, %v492
        %v603 = vpack.c.b16 %v497, %v495
        %v604 = vpack.c.b16 %v498, %v496
        %v605 = vpack.c.b16 %v501, %v499
        %v606 = vpack.c.b16 %v502, %v500
        %v607 = vpack.c.b16 %v505, %v503
        %v608 = vpack.c.b16 %v506, %v504
        %v609 = vpack.c.b16 %v509, %v507
        %v610 = vpack.c.b16 %v510, %v508
        %v611 = vpack.c.b16 %v513, %v511
        %v612 = vpack.c.b16 %v514, %v512
        %v613 = vpack.c.b16 %v517, %v515
        %v614 = vpack.c.b16 %v518, %v516
        %v615 = vpack.c.b16 %v521, %v519
        %v616 = vpack.c.b16 %v522, %v520
        %v617 = vpack.c.b16 %v525, %v523
        %v618 = vpack.c.b16 %v526, %v524
        %v619 = vpack.c.b16 %v529, %v527
        %v620 = vpack.c.b16 %v530, %v528
        %v621 = vpack.c.b16 %v533, %v531
        %v622 = vpack.c.b16 %v534, %v532
        %v623 = vpack.c.b16 %v537, %v535
        %v624 = vpack.c.b16 %v538, %v536
        %v625 = vpack.c.b16 %v541, %v539
        %v626 = vpack.c.b16 %v542, %v540
        %v627 = vpack.c.b16 %v545, %v543
        %v628 = vpack.c.b16 %v546, %v544
        %v629 = vpack.c.b16 %v549, %v547
        %v630 = vpack.c.b16 %v550, %v548
        %v631 = vpack.c.b16 %v553, %v551
        %v632 = vpack.c.b16 %v554, %v552
        %v633 = vpack.c.b16 %v557, %v555
        %v634 = vpack.c.b16 %v558, %v556
        %v635 = vpack.c.b16 %v561, %v559
        %v636 = vpack.c.b16 %v562, %v560
        %v637 = vpack.c.b16 %v565, %v563
        %v638 = vpack.c.b16 %v566, %v564
        %v639 = vpack.c.b16 %v569, %v567
        %v640 = vpack.c.b16 %v570, %v568
        %v641 = vpack.c.b16 %v573, %v571
        %v642 = vpack.c.b16 %v574, %v572
        %v643 = vpack.c.b16 %v577, %v575
        %v644 = vpack.c.b16 %v578, %v576
        %v645 = vpack.c.b16 %v581, %v579
        %v646 = vpack.c.b16 %v582, %v580
        %711 = vmatpush.bf16.msra.mxu0 %v597
        %712 = vmatpush.bf16.msra.mxu0 %v595
        %713 = vmatpush.bf16.msra.mxu0 %v593
        %714 = vmatpush.bf16.msra.mxu0 %v591
        %715 = vmatpush.bf16.msra.mxu0 %v589
        %716 = vmatpush.bf16.msra.mxu0 %v587
        %717 = vmatpush.bf16.msra.mxu0 %v585
        %718 = vmatpush.bf16.msra.mxu0 %v583
        %719 = vmatmul.bf16.gmra.mxu0 %v289
        %v720 = vpop.f32.mrf.mxu0
        %v721 = vadd.f32 %v387, %v720
        %v722 = vpop.f32.mrf.mxu0
        %v723 = vadd.f32 %v387, %v722
        %724 = vmatmul.bf16.gmra.mxu0 %v293
        %v725 = vpop.f32.mrf.mxu0
        %v726 = vadd.f32 %v387, %v725
        %v727 = vpop.f32.mrf.mxu0
        %v728 = vadd.f32 %v387, %v727
        %729 = vmatmul.bf16.gmra.mxu0 %v297
        %v730 = vpop.f32.mrf.mxu0
        %v731 = vadd.f32 %v387, %v730
        %v732 = vpop.f32.mrf.mxu0
        %v733 = vadd.f32 %v387, %v732
        %734 = vmatmul.bf16.gmra.mxu0 %v301
        %v735 = vpop.f32.mrf.mxu0
        %v736 = vadd.f32 %v387, %v735
        %v737 = vpop.f32.mrf.mxu0
        %v738 = vadd.f32 %v387, %v737
        %739 = vmatmul.bf16.gmra.mxu0 %v305
        %v740 = vpop.f32.mrf.mxu0
        %v741 = vadd.f32 %v387, %v740
        %v742 = vpop.f32.mrf.mxu0
        %v743 = vadd.f32 %v387, %v742
        %744 = vmatmul.bf16.gmra.mxu0 %v309
        %v745 = vpop.f32.mrf.mxu0
        %v746 = vadd.f32 %v387, %v745
        %v747 = vpop.f32.mrf.mxu0
        %v748 = vadd.f32 %v387, %v747
        %749 = vmatmul.bf16.gmra.mxu0 %v313
        %v750 = vpop.f32.mrf.mxu0
        %v751 = vadd.f32 %v387, %v750
        %v752 = vpop.f32.mrf.mxu0
        %v753 = vadd.f32 %v387, %v752
        %754 = vmatmul.bf16.gmra.mxu0 %v317
        %v755 = vpop.f32.mrf.mxu0
        %v756 = vadd.f32 %v387, %v755
        %v757 = vpop.f32.mrf.mxu0
        %v758 = vadd.f32 %v387, %v757
        %759 = vdwg.mxu0
        %760 = vmatpush.bf16.msra.mxu0 %v613
        %761 = vmatpush.bf16.msra.mxu0 %v611
        %762 = vmatpush.bf16.msra.mxu0 %v609
        %763 = vmatpush.bf16.msra.mxu0 %v607
        %764 = vmatpush.bf16.msra.mxu0 %v605
        %765 = vmatpush.bf16.msra.mxu0 %v603
        %766 = vmatpush.bf16.msra.mxu0 %v601
        %767 = vmatpush.bf16.msra.mxu0 %v599
        %768 = vmatmul.bf16.gmra.mxu0 %v290
        %v769 = vpop.f32.mrf.mxu0
        %v770 = vadd.f32 %v721, %v769
        %v771 = vpop.f32.mrf.mxu0
        %v772 = vadd.f32 %v723, %v771
        %773 = vmatmul.bf16.gmra.mxu0 %v294
        %v774 = vpop.f32.mrf.mxu0
        %v775 = vadd.f32 %v726, %v774
        %v776 = vpop.f32.mrf.mxu0
        %v777 = vadd.f32 %v728, %v776
        %778 = vmatmul.bf16.gmra.mxu0 %v298
        %v779 = vpop.f32.mrf.mxu0
        %v780 = vadd.f32 %v731, %v779
        %v781 = vpop.f32.mrf.mxu0
        %v782 = vadd.f32 %v733, %v781
        %783 = vmatmul.bf16.gmra.mxu0 %v302
        %v784 = vpop.f32.mrf.mxu0
        %v785 = vadd.f32 %v736, %v784
        %v786 = vpop.f32.mrf.mxu0
        %v787 = vadd.f32 %v738, %v786
        %788 = vmatmul.bf16.gmra.mxu0 %v306
        %v789 = vpop.f32.mrf.mxu0
        %v790 = vadd.f32 %v741, %v789
        %v791 = vpop.f32.mrf.mxu0
        %v792 = vadd.f32 %v743, %v791
        %793 = vmatmul.bf16.gmra.mxu0 %v310
        %v794 = vpop.f32.mrf.mxu0
        %v795 = vadd.f32 %v746, %v794
        %v796 = vpop.f32.mrf.mxu0
        %v797 = vadd.f32 %v748, %v796
        %798 = vmatmul.bf16.gmra.mxu0 %v314
        %v799 = vpop.f32.mrf.mxu0
        %v800 = vadd.f32 %v751, %v799
        %v801 = vpop.f32.mrf.mxu0
        %v802 = vadd.f32 %v753, %v801
        %803 = vmatmul.bf16.gmra.mxu0 %v318
        %v804 = vpop.f32.mrf.mxu0
        %v805 = vadd.f32 %v756, %v804
        %v806 = vpop.f32.mrf.mxu0
        %v807 = vadd.f32 %v758, %v806
        %808 = vdwg.mxu0
        %809 = vmatpush.bf16.msra.mxu0 %v629
        %810 = vmatpush.bf16.msra.mxu0 %v627
        %811 = vmatpush.bf16.msra.mxu0 %v625
        %812 = vmatpush.bf16.msra.mxu0 %v623
        %813 = vmatpush.bf16.msra.mxu0 %v621
        %814 = vmatpush.bf16.msra.mxu0 %v619
        %815 = vmatpush.bf16.msra.mxu0 %v617
        %816 = vmatpush.bf16.msra.mxu0 %v615
        %817 = vmatmul.bf16.gmra.mxu0 %v291
        %v818 = vpop.f32.mrf.mxu0
        %v819 = vadd.f32 %v770, %v818
        %v820 = vpop.f32.mrf.mxu0
        %v821 = vadd.f32 %v772, %v820
        %822 = vmatmul.bf16.gmra.mxu0 %v295
        %v823 = vpop.f32.mrf.mxu0
        %v824 = vadd.f32 %v775, %v823
        %v825 = vpop.f32.mrf.mxu0
        %v826 = vadd.f32 %v777, %v825
        %827 = vmatmul.bf16.gmra.mxu0 %v299
        %v828 = vpop.f32.mrf.mxu0
        %v829 = vadd.f32 %v780, %v828
        %v830 = vpop.f32.mrf.mxu0
        %v831 = vadd.f32 %v782, %v830
        %832 = vmatmul.bf16.gmra.mxu0 %v303
        %v833 = vpop.f32.mrf.mxu0
        %v834 = vadd.f32 %v785, %v833
        %v835 = vpop.f32.mrf.mxu0
        %v836 = vadd.f32 %v787, %v835
        %837 = vmatmul.bf16.gmra.mxu0 %v307
        %v838 = vpop.f32.mrf.mxu0
        %v839 = vadd.f32 %v790, %v838
        %v840 = vpop.f32.mrf.mxu0
        %v841 = vadd.f32 %v792, %v840
        %842 = vmatmul.bf16.gmra.mxu0 %v311
        %v843 = vpop.f32.mrf.mxu0
        %v844 = vadd.f32 %v795, %v843
        %v845 = vpop.f32.mrf.mxu0
        %v846 = vadd.f32 %v797, %v845
        %847 = vmatmul.bf16.gmra.mxu0 %v315
        %v848 = vpop.f32.mrf.mxu0
        %v849 = vadd.f32 %v800, %v848
        %v850 = vpop.f32.mrf.mxu0
        %v851 = vadd.f32 %v802, %v850
        %852 = vmatmul.bf16.gmra.mxu0 %v319
        %v853 = vpop.f32.mrf.mxu0
        %v854 = vadd.f32 %v805, %v853
        %v855 = vpop.f32.mrf.mxu0
        %v856 = vadd.f32 %v807, %v855
        %857 = vdwg.mxu0
        %858 = vmatpush.bf16.msra.mxu0 %v645
        %859 = vmatpush.bf16.msra.mxu0 %v643
        %860 = vmatpush.bf16.msra.mxu0 %v641
        %861 = vmatpush.bf16.msra.mxu0 %v639
        %862 = vmatpush.bf16.msra.mxu0 %v637
        %863 = vmatpush.bf16.msra.mxu0 %v635
        %864 = vmatpush.bf16.msra.mxu0 %v633
        %865 = vmatpush.bf16.msra.mxu0 %v631
        %866 = vmatmul.bf16.gmra.mxu0 %v292
        %v867 = vpop.f32.mrf.mxu0
        %v868 = vadd.f32 %v819, %v867
        %v869 = vpop.f32.mrf.mxu0
        %v870 = vadd.f32 %v821, %v869
        %871 = vmatmul.bf16.gmra.mxu0 %v296
        %v872 = vpop.f32.mrf.mxu0
        %v873 = vadd.f32 %v824, %v872
        %v874 = vpop.f32.mrf.mxu0
        %v875 = vadd.f32 %v826, %v874
        %876 = vmatmul.bf16.gmra.mxu0 %v300
        %v877 = vpop.f32.mrf.mxu0
        %v878 = vadd.f32 %v829, %v877
        %v879 = vpop.f32.mrf.mxu0
        %v880 = vadd.f32 %v831, %v879
        %881 = vmatmul.bf16.gmra.mxu0 %v304
        %v882 = vpop.f32.mrf.mxu0
        %v883 = vadd.f32 %v834, %v882
        %v884 = vpop.f32.mrf.mxu0
        %v885 = vadd.f32 %v836, %v884
        %886 = vmatmul.bf16.gmra.mxu0 %v308
        %v887 = vpop.f32.mrf.mxu0
        %v888 = vadd.f32 %v839, %v887
        %v889 = vpop.f32.mrf.mxu0
        %v890 = vadd.f32 %v841, %v889
        %891 = vmatmul.bf16.gmra.mxu0 %v312
        %v892 = vpop.f32.mrf.mxu0
        %v893 = vadd.f32 %v844, %v892
        %v894 = vpop.f32.mrf.mxu0
        %v895 = vadd.f32 %v846, %v894
        %896 = vmatmul.bf16.gmra.mxu0 %v316
        %v897 = vpop.f32.mrf.mxu0
        %v898 = vadd.f32 %v849, %v897
        %v899 = vpop.f32.mrf.mxu0
        %v900 = vadd.f32 %v851, %v899
        %901 = vmatmul.bf16.gmra.mxu0 %v320
        %v902 = vpop.f32.mrf.mxu0
        %v903 = vadd.f32 %v854, %v902
        %v904 = vpop.f32.mrf.mxu0
        %v905 = vadd.f32 %v856, %v904
        %906 = vdwg.mxu0
        %907 = vmatpush.bf16.msra.mxu0 %v598
        %908 = vmatpush.bf16.msra.mxu0 %v596
        %909 = vmatpush.bf16.msra.mxu0 %v594
        %910 = vmatpush.bf16.msra.mxu0 %v592
        %911 = vmatpush.bf16.msra.mxu0 %v590
        %912 = vmatpush.bf16.msra.mxu0 %v588
        %913 = vmatpush.bf16.msra.mxu0 %v586
        %914 = vmatpush.bf16.msra.mxu0 %v584
        %915 = vmatmul.bf16.gmra.mxu0 %v289
        %v916 = vpop.f32.mrf.mxu0
        %v917 = vadd.f32 %v388, %v916
        %v918 = vpop.f32.mrf.mxu0
        %v919 = vadd.f32 %v388, %v918
        %920 = vmatmul.bf16.gmra.mxu0 %v293
        %v921 = vpop.f32.mrf.mxu0
        %v922 = vadd.f32 %v388, %v921
        %v923 = vpop.f32.mrf.mxu0
        %v924 = vadd.f32 %v388, %v923
        %925 = vmatmul.bf16.gmra.mxu0 %v297
        %v926 = vpop.f32.mrf.mxu0
        %v927 = vadd.f32 %v388, %v926
        %v928 = vpop.f32.mrf.mxu0
        %v929 = vadd.f32 %v388, %v928
        %930 = vmatmul.bf16.gmra.mxu0 %v301
        %v931 = vpop.f32.mrf.mxu0
        %v932 = vadd.f32 %v388, %v931
        %v933 = vpop.f32.mrf.mxu0
        %v934 = vadd.f32 %v388, %v933
        %935 = vmatmul.bf16.gmra.mxu0 %v305
        %v936 = vpop.f32.mrf.mxu0
        %v937 = vadd.f32 %v388, %v936
        %v938 = vpop.f32.mrf.mxu0
        %v939 = vadd.f32 %v388, %v938
        %940 = vmatmul.bf16.gmra.mxu0 %v309
        %v941 = vpop.f32.mrf.mxu0
        %v942 = vadd.f32 %v388, %v941
        %v943 = vpop.f32.mrf.mxu0
        %v944 = vadd.f32 %v388, %v943
        %945 = vmatmul.bf16.gmra.mxu0 %v313
        %v946 = vpop.f32.mrf.mxu0
        %v947 = vadd.f32 %v388, %v946
        %v948 = vpop.f32.mrf.mxu0
        %v949 = vadd.f32 %v388, %v948
        %950 = vmatmul.bf16.gmra.mxu0 %v317
        %v951 = vpop.f32.mrf.mxu0
        %v952 = vadd.f32 %v388, %v951
        %v953 = vpop.f32.mrf.mxu0
        %v954 = vadd.f32 %v388, %v953
        %955 = vdwg.mxu0
        %956 = vmatpush.bf16.msra.mxu0 %v614
        %957 = vmatpush.bf16.msra.mxu0 %v612
        %958 = vmatpush.bf16.msra.mxu0 %v610
        %959 = vmatpush.bf16.msra.mxu0 %v608
        %960 = vmatpush.bf16.msra.mxu0 %v606
        %961 = vmatpush.bf16.msra.mxu0 %v604
        %962 = vmatpush.bf16.msra.mxu0 %v602
        %963 = vmatpush.bf16.msra.mxu0 %v600
        %964 = vmatmul.bf16.gmra.mxu0 %v290
        %v965 = vpop.f32.mrf.mxu0
        %v966 = vadd.f32 %v917, %v965
        %v967 = vpop.f32.mrf.mxu0
        %v968 = vadd.f32 %v919, %v967
        %969 = vmatmul.bf16.gmra.mxu0 %v294
        %v970 = vpop.f32.mrf.mxu0
        %v971 = vadd.f32 %v922, %v970
        %v972 = vpop.f32.mrf.mxu0
        %v973 = vadd.f32 %v924, %v972
        %974 = vmatmul.bf16.gmra.mxu0 %v298
        %v975 = vpop.f32.mrf.mxu0
        %v976 = vadd.f32 %v927, %v975
        %v977 = vpop.f32.mrf.mxu0
        %v978 = vadd.f32 %v929, %v977
        %979 = vmatmul.bf16.gmra.mxu0 %v302
        %v980 = vpop.f32.mrf.mxu0
        %v981 = vadd.f32 %v932, %v980
        %v982 = vpop.f32.mrf.mxu0
        %v983 = vadd.f32 %v934, %v982
        %984 = vmatmul.bf16.gmra.mxu0 %v306
        %v985 = vpop.f32.mrf.mxu0
        %v986 = vadd.f32 %v937, %v985
        %v987 = vpop.f32.mrf.mxu0
        %v988 = vadd.f32 %v939, %v987
        %989 = vmatmul.bf16.gmra.mxu0 %v310
        %v990 = vpop.f32.mrf.mxu0
        %v991 = vadd.f32 %v942, %v990
        %v992 = vpop.f32.mrf.mxu0
        %v993 = vadd.f32 %v944, %v992
        %994 = vmatmul.bf16.gmra.mxu0 %v314
        %v995 = vpop.f32.mrf.mxu0
        %v996 = vadd.f32 %v947, %v995
        %v997 = vpop.f32.mrf.mxu0
        %v998 = vadd.f32 %v949, %v997
        %999 = vmatmul.bf16.gmra.mxu0 %v318
        %v1000 = vpop.f32.mrf.mxu0
        %v1001 = vadd.f32 %v952, %v1000
        %v1002 = vpop.f32.mrf.mxu0
        %v1003 = vadd.f32 %v954, %v1002
        %1004 = vdwg.mxu0
        %1005 = vmatpush.bf16.msra.mxu0 %v630
        %1006 = vmatpush.bf16.msra.mxu0 %v628
        %1007 = vmatpush.bf16.msra.mxu0 %v626
        %1008 = vmatpush.bf16.msra.mxu0 %v624
        %1009 = vmatpush.bf16.msra.mxu0 %v622
        %1010 = vmatpush.bf16.msra.mxu0 %v620
        %1011 = vmatpush.bf16.msra.mxu0 %v618
        %1012 = vmatpush.bf16.msra.mxu0 %v616
        %1013 = vmatmul.bf16.gmra.mxu0 %v291
        %v1014 = vpop.f32.mrf.mxu0
        %v1015 = vadd.f32 %v966, %v1014
        %v1016 = vpop.f32.mrf.mxu0
        %v1017 = vadd.f32 %v968, %v1016
        %1018 = vmatmul.bf16.gmra.mxu0 %v295
        %v1019 = vpop.f32.mrf.mxu0
        %v1020 = vadd.f32 %v971, %v1019
        %v1021 = vpop.f32.mrf.mxu0
        %v1022 = vadd.f32 %v973, %v1021
        %1023 = vmatmul.bf16.gmra.mxu0 %v299
        %v1024 = vpop.f32.mrf.mxu0
        %v1025 = vadd.f32 %v976, %v1024
        %v1026 = vpop.f32.mrf.mxu0
        %v1027 = vadd.f32 %v978, %v1026
        %1028 = vmatmul.bf16.gmra.mxu0 %v303
        %v1029 = vpop.f32.mrf.mxu0
        %v1030 = vadd.f32 %v981, %v1029
        %v1031 = vpop.f32.mrf.mxu0
        %v1032 = vadd.f32 %v983, %v1031
        %1033 = vmatmul.bf16.gmra.mxu0 %v307
        %v1034 = vpop.f32.mrf.mxu0
        %v1035 = vadd.f32 %v986, %v1034
        %v1036 = vpop.f32.mrf.mxu0
        %v1037 = vadd.f32 %v988, %v1036
        %1038 = vmatmul.bf16.gmra.mxu0 %v311
        %v1039 = vpop.f32.mrf.mxu0
        %v1040 = vadd.f32 %v991, %v1039
        %v1041 = vpop.f32.mrf.mxu0
        %v1042 = vadd.f32 %v993, %v1041
        %1043 = vmatmul.bf16.gmra.mxu0 %v315
        %v1044 = vpop.f32.mrf.mxu0
        %v1045 = vadd.f32 %v996, %v1044
        %v1046 = vpop.f32.mrf.mxu0
        %v1047 = vadd.f32 %v998, %v1046
        %1048 = vmatmul.bf16.gmra.mxu0 %v319
        %v1049 = vpop.f32.mrf.mxu0
        %v1050 = vadd.f32 %v1001, %v1049
        %v1051 = vpop.f32.mrf.mxu0
        %v1052 = vadd.f32 %v1003, %v1051
        %1053 = vdwg.mxu0
        %1054 = vmatpush.bf16.msra.mxu0 %v646
        %1055 = vmatpush.bf16.msra.mxu0 %v644
        %1056 = vmatpush.bf16.msra.mxu0 %v642
        %1057 = vmatpush.bf16.msra.mxu0 %v640
        %1058 = vmatpush.bf16.msra.mxu0 %v638
        %1059 = vmatpush.bf16.msra.mxu0 %v636
        %1060 = vmatpush.bf16.msra.mxu0 %v634
        %1061 = vmatpush.bf16.msra.mxu0 %v632
        %1062 = vmatmul.bf16.gmra.mxu0 %v292
        %v1063 = vpop.f32.mrf.mxu0
        %v1064 = vadd.f32 %v1015, %v1063
        %v1065 = vpop.f32.mrf.mxu0
        %v1066 = vadd.f32 %v1017, %v1065
        %1067 = vmatmul.bf16.gmra.mxu0 %v296
        %v1068 = vpop.f32.mrf.mxu0
        %v1069 = vadd.f32 %v1020, %v1068
        %v1070 = vpop.f32.mrf.mxu0
        %v1071 = vadd.f32 %v1022, %v1070
        %1072 = vmatmul.bf16.gmra.mxu0 %v300
        %v1073 = vpop.f32.mrf.mxu0
        %v1074 = vadd.f32 %v1025, %v1073
        %v1075 = vpop.f32.mrf.mxu0
        %v1076 = vadd.f32 %v1027, %v1075
        %1077 = vmatmul.bf16.gmra.mxu0 %v304
        %v1078 = vpop.f32.mrf.mxu0
        %v1079 = vadd.f32 %v1030, %v1078
        %v1080 = vpop.f32.mrf.mxu0
        %v1081 = vadd.f32 %v1032, %v1080
        %1082 = vmatmul.bf16.gmra.mxu0 %v308
        %v1083 = vpop.f32.mrf.mxu0
        %v1084 = vadd.f32 %v1035, %v1083
        %v1085 = vpop.f32.mrf.mxu0
        %v1086 = vadd.f32 %v1037, %v1085
        %1087 = vmatmul.bf16.gmra.mxu0 %v312
        %v1088 = vpop.f32.mrf.mxu0
        %v1089 = vadd.f32 %v1040, %v1088
        %v1090 = vpop.f32.mrf.mxu0
        %v1091 = vadd.f32 %v1042, %v1090
        %1092 = vmatmul.bf16.gmra.mxu0 %v316
        %v1093 = vpop.f32.mrf.mxu0
        %v1094 = vadd.f32 %v1045, %v1093
        %v1095 = vpop.f32.mrf.mxu0
        %v1096 = vadd.f32 %v1047, %v1095
        %1097 = vmatmul.bf16.gmra.mxu0 %v320
        %v1098 = vpop.f32.mrf.mxu0
        %v1099 = vadd.f32 %v1050, %v1098
        %v1100 = vpop.f32.mrf.mxu0
        %v1101 = vadd.f32 %v1052, %v1100
        %1102 = vdwg.mxu0
        %v1103 = vmul.f32 %v868, 0.5
        %v1104 = vmul.f32 %v1064, 0.5
        %v1105 = vmul.f32 %v870, 0.5
        %v1106 = vmul.f32 %v1066, 0.5
        %v1107 = vmul.f32 %v873, 0.5
        %v1108 = vmul.f32 %v1069, 0.5
        %v1109 = vmul.f32 %v875, 0.5
        %v1110 = vmul.f32 %v1071, 0.5
        %v1111 = vmul.f32 %v878, 0.5
        %v1112 = vmul.f32 %v1074, 0.5
        %v1113 = vmul.f32 %v880, 0.5
        %v1114 = vmul.f32 %v1076, 0.5
        %v1115 = vmul.f32 %v883, 0.5
        %v1116 = vmul.f32 %v1079, 0.5
        %v1117 = vmul.f32 %v885, 0.5
        %v1118 = vmul.f32 %v1081, 0.5
        %v1119 = vmul.f32 %v888, 0.5
        %v1120 = vmul.f32 %v1084, 0.5
        %v1121 = vmul.f32 %v890, 0.5
        %v1122 = vmul.f32 %v1086, 0.5
        %v1123 = vmul.f32 %v893, 0.5
        %v1124 = vmul.f32 %v1089, 0.5
        %v1125 = vmul.f32 %v895, 0.5
        %v1126 = vmul.f32 %v1091, 0.5
        %v1127 = vmul.f32 %v898, 0.5
        %v1128 = vmul.f32 %v1094, 0.5
        %v1129 = vmul.f32 %v900, 0.5
        %v1130 = vmul.f32 %v1096, 0.5
        %v1131 = vmul.f32 %v903, 0.5
        %v1132 = vmul.f32 %v1099, 0.5
        %v1133 = vmul.f32 %v905, 0.5
        %v1134 = vmul.f32 %v1101, 0.5
        %v1135 = vmul.f32 %v868, 0.70710677
        %v1136 = vmul.f32 %v1064, 0.70710677
        %v1137 = vmul.f32 %v870, 0.70710677
        %v1138 = vmul.f32 %v1066, 0.70710677
        %v1139 = vmul.f32 %v873, 0.70710677
        %v1140 = vmul.f32 %v1069, 0.70710677
        %v1141 = vmul.f32 %v875, 0.70710677
        %v1142 = vmul.f32 %v1071, 0.70710677
        %v1143 = vmul.f32 %v878, 0.70710677
        %v1144 = vmul.f32 %v1074, 0.70710677
        %v1145 = vmul.f32 %v880, 0.70710677
        %v1146 = vmul.f32 %v1076, 0.70710677
        %v1147 = vmul.f32 %v883, 0.70710677
        %v1148 = vmul.f32 %v1079, 0.70710677
        %v1149 = vmul.f32 %v885, 0.70710677
        %v1150 = vmul.f32 %v1081, 0.70710677
        %v1151 = vmul.f32 %v888, 0.70710677
        %v1152 = vmul.f32 %v1084, 0.70710677
        %v1153 = vmul.f32 %v890, 0.70710677
        %v1154 = vmul.f32 %v1086, 0.70710677
        %v1155 = vmul.f32 %v893, 0.70710677
        %v1156 = vmul.f32 %v1089, 0.70710677
        %v1157 = vmul.f32 %v895, 0.70710677
        %v1158 = vmul.f32 %v1091, 0.70710677
        %v1159 = vmul.f32 %v898, 0.70710677
        %v1160 = vmul.f32 %v1094, 0.70710677
        %v1161 = vmul.f32 %v900, 0.70710677
        %v1162 = vmul.f32 %v1096, 0.70710677
        %v1163 = vmul.f32 %v903, 0.70710677
        %v1164 = vmul.f32 %v1099, 0.70710677
        %v1165 = vmul.f32 %v905, 0.70710677
        %v1166 = vmul.f32 %v1101, 0.70710677
        %v1167 = vmul.f32 %v1135, %v1135
        %v1168 = vmin.f32 16.0, %v1167
        %v1169 = vmul.f32 %v1168, 2.1237322e-06
        %v1170 = vadd.f32 %v1169, 0.00028619796
        %v1171 = vmul.f32 %v1168, %v1170
        %v1172 = vadd.f32 %v1171, 0.0036580483
        %v1173 = vmul.f32 %v1168, %v1172
        %v1174 = vadd.f32 %v1173, 0.05243302
        %v1175 = vmul.f32 %v1168, %v1174
        %v1176 = vadd.f32 %v1175, 0.18741608
        %v1177 = vmul.f32 %v1168, %v1176
        %v1178 = vadd.f32 %v1177, 1.1283791
        %v1179 = vmul.f32 %v1135, %v1178
        %v1180 = vmul.f32 %v1168, 3.8918573e-05
        %v1181 = vadd.f32 %v1180, 0.001143296
        %v1182 = vmul.f32 %v1168, %v1181
        %v1183 = vadd.f32 %v1182, 0.014752088
        %v1184 = vmul.f32 %v1168, %v1183
        %v1185 = vadd.f32 %v1184, 0.112945676
        %v1186 = vmul.f32 %v1168, %v1185
        %v1187 = vadd.f32 %v1186, 0.4994258
        %v1188 = vmul.f32 %v1168, %v1187
        %v1189 = vadd.f32 %v1188, 1.0
        %v1190 = vrcp.pop %v1189
        %v1191 = vmul.f32 %v1189, %v1190
        %v1192 = vsub.f32 1.0, %v1191
        %v1193 = vmul.f32 %v1190, %v1192
        %v1194 = vadd.f32 %v1190, %v1193
        %vm1195 = vweird.f32 %v1189
        %vm1196 = vweird.f32 %v1190
        %vm1197 = vmor %vm1195, %vm1196
        %v1198 = vsel %vm1197, %v1190, %v1194
        %v1199 = vand.u32 2147483647, %v1189
        %vm1200 = vcmp.eq.f32.partialorder %v1199, 8.507059e+37
        %v1201 = vand.u32 %v1189, 2147483648
        %v1202 = vor.u32 1.1754944e-38, %v1201
        %v1203 = vsel %vm1200, %v1202, %v1198
        %v1204 = vmul.f32 %v1179, %v1203
        %v1205 = vmin.f32 %v1204, 1.0
        %v1206 = vmax.f32 %v1205, -1.0
        %v1207 = vmul.f32 %v1136, %v1136
        %v1208 = vmin.f32 16.0, %v1207
        %v1209 = vmul.f32 %v1208, 2.1237322e-06
        %v1210 = vadd.f32 %v1209, 0.00028619796
        %v1211 = vmul.f32 %v1208, %v1210
        %v1212 = vadd.f32 %v1211, 0.0036580483
        %v1213 = vmul.f32 %v1208, %v1212
        %v1214 = vadd.f32 %v1213, 0.05243302
        %v1215 = vmul.f32 %v1208, %v1214
        %v1216 = vadd.f32 %v1215, 0.18741608
        %v1217 = vmul.f32 %v1208, %v1216
        %v1218 = vadd.f32 %v1217, 1.1283791
        %v1219 = vmul.f32 %v1136, %v1218
        %v1220 = vmul.f32 %v1208, 3.8918573e-05
        %v1221 = vadd.f32 %v1220, 0.001143296
        %v1222 = vmul.f32 %v1208, %v1221
        %v1223 = vadd.f32 %v1222, 0.014752088
        %v1224 = vmul.f32 %v1208, %v1223
        %v1225 = vadd.f32 %v1224, 0.112945676
        %v1226 = vmul.f32 %v1208, %v1225
        %v1227 = vadd.f32 %v1226, 0.4994258
        %v1228 = vmul.f32 %v1208, %v1227
        %v1229 = vadd.f32 %v1228, 1.0
        %v1230 = vrcp.pop %v1229
        %v1231 = vmul.f32 %v1229, %v1230
        %v1232 = vsub.f32 1.0, %v1231
        %v1233 = vmul.f32 %v1230, %v1232
        %v1234 = vadd.f32 %v1230, %v1233
        %vm1235 = vweird.f32 %v1229
        %vm1236 = vweird.f32 %v1230
        %vm1237 = vmor %vm1235, %vm1236
        %v1238 = vsel %vm1237, %v1230, %v1234
        %v1239 = vand.u32 2147483647, %v1229
        %vm1240 = vcmp.eq.f32.partialorder %v1239, 8.507059e+37
        %v1241 = vand.u32 %v1229, 2147483648
        %v1242 = vor.u32 1.1754944e-38, %v1241
        %v1243 = vsel %vm1240, %v1242, %v1238
        %v1244 = vmul.f32 %v1219, %v1243
        %v1245 = vmin.f32 %v1244, 1.0
        %v1246 = vmax.f32 %v1245, -1.0
        %v1247 = vmul.f32 %v1137, %v1137
        %v1248 = vmin.f32 16.0, %v1247
        %v1249 = vmul.f32 %v1248, 2.1237322e-06
        %v1250 = vadd.f32 %v1249, 0.00028619796
        %v1251 = vmul.f32 %v1248, %v1250
        %v1252 = vadd.f32 %v1251, 0.0036580483
        %v1253 = vmul.f32 %v1248, %v1252
        %v1254 = vadd.f32 %v1253, 0.05243302
        %v1255 = vmul.f32 %v1248, %v1254
        %v1256 = vadd.f32 %v1255, 0.18741608
        %v1257 = vmul.f32 %v1248, %v1256
        %v1258 = vadd.f32 %v1257, 1.1283791
        %v1259 = vmul.f32 %v1137, %v1258
        %v1260 = vmul.f32 %v1248, 3.8918573e-05
        %v1261 = vadd.f32 %v1260, 0.001143296
        %v1262 = vmul.f32 %v1248, %v1261
        %v1263 = vadd.f32 %v1262, 0.014752088
        %v1264 = vmul.f32 %v1248, %v1263
        %v1265 = vadd.f32 %v1264, 0.112945676
        %v1266 = vmul.f32 %v1248, %v1265
        %v1267 = vadd.f32 %v1266, 0.4994258
        %v1268 = vmul.f32 %v1248, %v1267
        %v1269 = vadd.f32 %v1268, 1.0
        %v1270 = vrcp.pop %v1269
        %v1271 = vmul.f32 %v1269, %v1270
        %v1272 = vsub.f32 1.0, %v1271
        %v1273 = vmul.f32 %v1270, %v1272
        %v1274 = vadd.f32 %v1270, %v1273
        %vm1275 = vweird.f32 %v1269
        %vm1276 = vweird.f32 %v1270
        %vm1277 = vmor %vm1275, %vm1276
        %v1278 = vsel %vm1277, %v1270, %v1274
        %v1279 = vand.u32 2147483647, %v1269
        %vm1280 = vcmp.eq.f32.partialorder %v1279, 8.507059e+37
        %v1281 = vand.u32 %v1269, 2147483648
        %v1282 = vor.u32 1.1754944e-38, %v1281
        %v1283 = vsel %vm1280, %v1282, %v1278
        %v1284 = vmul.f32 %v1259, %v1283
        %v1285 = vmin.f32 %v1284, 1.0
        %v1286 = vmax.f32 %v1285, -1.0
        %v1287 = vmul.f32 %v1138, %v1138
        %v1288 = vmin.f32 16.0, %v1287
        %v1289 = vmul.f32 %v1288, 2.1237322e-06
        %v1290 = vadd.f32 %v1289, 0.00028619796
        %v1291 = vmul.f32 %v1288, %v1290
        %v1292 = vadd.f32 %v1291, 0.0036580483
        %v1293 = vmul.f32 %v1288, %v1292
        %v1294 = vadd.f32 %v1293, 0.05243302
        %v1295 = vmul.f32 %v1288, %v1294
        %v1296 = vadd.f32 %v1295, 0.18741608
        %v1297 = vmul.f32 %v1288, %v1296
        %v1298 = vadd.f32 %v1297, 1.1283791
        %v1299 = vmul.f32 %v1138, %v1298
        %v1300 = vmul.f32 %v1288, 3.8918573e-05
        %v1301 = vadd.f32 %v1300, 0.001143296
        %v1302 = vmul.f32 %v1288, %v1301
        %v1303 = vadd.f32 %v1302, 0.014752088
        %v1304 = vmul.f32 %v1288, %v1303
        %v1305 = vadd.f32 %v1304, 0.112945676
        %v1306 = vmul.f32 %v1288, %v1305
        %v1307 = vadd.f32 %v1306, 0.4994258
        %v1308 = vmul.f32 %v1288, %v1307
        %v1309 = vadd.f32 %v1308, 1.0
        %v1310 = vrcp.pop %v1309
        %v1311 = vmul.f32 %v1309, %v1310
        %v1312 = vsub.f32 1.0, %v1311
        %v1313 = vmul.f32 %v1310, %v1312
        %v1314 = vadd.f32 %v1310, %v1313
        %vm1315 = vweird.f32 %v1309
        %vm1316 = vweird.f32 %v1310
        %vm1317 = vmor %vm1315, %vm1316
        %v1318 = vsel %vm1317, %v1310, %v1314
        %v1319 = vand.u32 2147483647, %v1309
        %vm1320 = vcmp.eq.f32.partialorder %v1319, 8.507059e+37
        %v1321 = vand.u32 %v1309, 2147483648
        %v1322 = vor.u32 1.1754944e-38, %v1321
        %v1323 = vsel %vm1320, %v1322, %v1318
        %v1324 = vmul.f32 %v1299, %v1323
        %v1325 = vmin.f32 %v1324, 1.0
        %v1326 = vmax.f32 %v1325, -1.0
        %v1327 = vmul.f32 %v1139, %v1139
        %v1328 = vmin.f32 16.0, %v1327
        %v1329 = vmul.f32 %v1328, 2.1237322e-06
        %v1330 = vadd.f32 %v1329, 0.00028619796
        %v1331 = vmul.f32 %v1328, %v1330
        %v1332 = vadd.f32 %v1331, 0.0036580483
        %v1333 = vmul.f32 %v1328, %v1332
        %v1334 = vadd.f32 %v1333, 0.05243302
        %v1335 = vmul.f32 %v1328, %v1334
        %v1336 = vadd.f32 %v1335, 0.18741608
        %v1337 = vmul.f32 %v1328, %v1336
        %v1338 = vadd.f32 %v1337, 1.1283791
        %v1339 = vmul.f32 %v1139, %v1338
        %v1340 = vmul.f32 %v1328, 3.8918573e-05
        %v1341 = vadd.f32 %v1340, 0.001143296
        %v1342 = vmul.f32 %v1328, %v1341
        %v1343 = vadd.f32 %v1342, 0.014752088
        %v1344 = vmul.f32 %v1328, %v1343
        %v1345 = vadd.f32 %v1344, 0.112945676
        %v1346 = vmul.f32 %v1328, %v1345
        %v1347 = vadd.f32 %v1346, 0.4994258
        %v1348 = vmul.f32 %v1328, %v1347
        %v1349 = vadd.f32 %v1348, 1.0
        %v1350 = vrcp.pop %v1349
        %v1351 = vmul.f32 %v1349, %v1350
        %v1352 = vsub.f32 1.0, %v1351
        %v1353 = vmul.f32 %v1350, %v1352
        %v1354 = vadd.f32 %v1350, %v1353
        %vm1355 = vweird.f32 %v1349
        %vm1356 = vweird.f32 %v1350
        %vm1357 = vmor %vm1355, %vm1356
        %v1358 = vsel %vm1357, %v1350, %v1354
        %v1359 = vand.u32 2147483647, %v1349
        %vm1360 = vcmp.eq.f32.partialorder %v1359, 8.507059e+37
        %v1361 = vand.u32 %v1349, 2147483648
        %v1362 = vor.u32 1.1754944e-38, %v1361
        %v1363 = vsel %vm1360, %v1362, %v1358
        %v1364 = vmul.f32 %v1339, %v1363
        %v1365 = vmin.f32 %v1364, 1.0
        %v1366 = vmax.f32 %v1365, -1.0
        %v1367 = vmul.f32 %v1140, %v1140
        %v1368 = vmin.f32 16.0, %v1367
        %v1369 = vmul.f32 %v1368, 2.1237322e-06
        %v1370 = vadd.f32 %v1369, 0.00028619796
        %v1371 = vmul.f32 %v1368, %v1370
        %v1372 = vadd.f32 %v1371, 0.0036580483
        %v1373 = vmul.f32 %v1368, %v1372
        %v1374 = vadd.f32 %v1373, 0.05243302
        %v1375 = vmul.f32 %v1368, %v1374
        %v1376 = vadd.f32 %v1375, 0.18741608
        %v1377 = vmul.f32 %v1368, %v1376
        %v1378 = vadd.f32 %v1377, 1.1283791
        %v1379 = vmul.f32 %v1140, %v1378
        %v1380 = vmul.f32 %v1368, 3.8918573e-05
        %v1381 = vadd.f32 %v1380, 0.001143296
        %v1382 = vmul.f32 %v1368, %v1381
        %v1383 = vadd.f32 %v1382, 0.014752088
        %v1384 = vmul.f32 %v1368, %v1383
        %v1385 = vadd.f32 %v1384, 0.112945676
        %v1386 = vmul.f32 %v1368, %v1385
        %v1387 = vadd.f32 %v1386, 0.4994258
        %v1388 = vmul.f32 %v1368, %v1387
        %v1389 = vadd.f32 %v1388, 1.0
        %v1390 = vrcp.pop %v1389
        %v1391 = vmul.f32 %v1389, %v1390
        %v1392 = vsub.f32 1.0, %v1391
        %v1393 = vmul.f32 %v1390, %v1392
        %v1394 = vadd.f32 %v1390, %v1393
        %vm1395 = vweird.f32 %v1389
        %vm1396 = vweird.f32 %v1390
        %vm1397 = vmor %vm1395, %vm1396
        %v1398 = vsel %vm1397, %v1390, %v1394
        %v1399 = vand.u32 2147483647, %v1389
        %vm1400 = vcmp.eq.f32.partialorder %v1399, 8.507059e+37
        %v1401 = vand.u32 %v1389, 2147483648
        %v1402 = vor.u32 1.1754944e-38, %v1401
        %v1403 = vsel %vm1400, %v1402, %v1398
        %v1404 = vmul.f32 %v1379, %v1403
        %v1405 = vmin.f32 %v1404, 1.0
        %v1406 = vmax.f32 %v1405, -1.0
        %v1407 = vmul.f32 %v1141, %v1141
        %v1408 = vmin.f32 16.0, %v1407
        %v1409 = vmul.f32 %v1408, 2.1237322e-06
        %v1410 = vadd.f32 %v1409, 0.00028619796
        %v1411 = vmul.f32 %v1408, %v1410
        %v1412 = vadd.f32 %v1411, 0.0036580483
        %v1413 = vmul.f32 %v1408, %v1412
        %v1414 = vadd.f32 %v1413, 0.05243302
        %v1415 = vmul.f32 %v1408, %v1414
        %v1416 = vadd.f32 %v1415, 0.18741608
        %v1417 = vmul.f32 %v1408, %v1416
        %v1418 = vadd.f32 %v1417, 1.1283791
        %v1419 = vmul.f32 %v1141, %v1418
        %v1420 = vmul.f32 %v1408, 3.8918573e-05
        %v1421 = vadd.f32 %v1420, 0.001143296
        %v1422 = vmul.f32 %v1408, %v1421
        %v1423 = vadd.f32 %v1422, 0.014752088
        %v1424 = vmul.f32 %v1408, %v1423
        %v1425 = vadd.f32 %v1424, 0.112945676
        %v1426 = vmul.f32 %v1408, %v1425
        %v1427 = vadd.f32 %v1426, 0.4994258
        %v1428 = vmul.f32 %v1408, %v1427
        %v1429 = vadd.f32 %v1428, 1.0
        %v1430 = vrcp.pop %v1429
        %v1431 = vmul.f32 %v1429, %v1430
        %v1432 = vsub.f32 1.0, %v1431
        %v1433 = vmul.f32 %v1430, %v1432
        %v1434 = vadd.f32 %v1430, %v1433
        %vm1435 = vweird.f32 %v1429
        %vm1436 = vweird.f32 %v1430
        %vm1437 = vmor %vm1435, %vm1436
        %v1438 = vsel %vm1437, %v1430, %v1434
        %v1439 = vand.u32 2147483647, %v1429
        %vm1440 = vcmp.eq.f32.partialorder %v1439, 8.507059e+37
        %v1441 = vand.u32 %v1429, 2147483648
        %v1442 = vor.u32 1.1754944e-38, %v1441
        %v1443 = vsel %vm1440, %v1442, %v1438
        %v1444 = vmul.f32 %v1419, %v1443
        %v1445 = vmin.f32 %v1444, 1.0
        %v1446 = vmax.f32 %v1445, -1.0
        %v1447 = vmul.f32 %v1142, %v1142
        %v1448 = vmin.f32 16.0, %v1447
        %v1449 = vmul.f32 %v1448, 2.1237322e-06
        %v1450 = vadd.f32 %v1449, 0.00028619796
        %v1451 = vmul.f32 %v1448, %v1450
        %v1452 = vadd.f32 %v1451, 0.0036580483
        %v1453 = vmul.f32 %v1448, %v1452
        %v1454 = vadd.f32 %v1453, 0.05243302
        %v1455 = vmul.f32 %v1448, %v1454
        %v1456 = vadd.f32 %v1455, 0.18741608
        %v1457 = vmul.f32 %v1448, %v1456
        %v1458 = vadd.f32 %v1457, 1.1283791
        %v1459 = vmul.f32 %v1142, %v1458
        %v1460 = vmul.f32 %v1448, 3.8918573e-05
        %v1461 = vadd.f32 %v1460, 0.001143296
        %v1462 = vmul.f32 %v1448, %v1461
        %v1463 = vadd.f32 %v1462, 0.014752088
        %v1464 = vmul.f32 %v1448, %v1463
        %v1465 = vadd.f32 %v1464, 0.112945676
        %v1466 = vmul.f32 %v1448, %v1465
        %v1467 = vadd.f32 %v1466, 0.4994258
        %v1468 = vmul.f32 %v1448, %v1467
        %v1469 = vadd.f32 %v1468, 1.0
        %v1470 = vrcp.pop %v1469
        %v1471 = vmul.f32 %v1469, %v1470
        %v1472 = vsub.f32 1.0, %v1471
        %v1473 = vmul.f32 %v1470, %v1472
        %v1474 = vadd.f32 %v1470, %v1473
        %vm1475 = vweird.f32 %v1469
        %vm1476 = vweird.f32 %v1470
        %vm1477 = vmor %vm1475, %vm1476
        %v1478 = vsel %vm1477, %v1470, %v1474
        %v1479 = vand.u32 2147483647, %v1469
        %vm1480 = vcmp.eq.f32.partialorder %v1479, 8.507059e+37
        %v1481 = vand.u32 %v1469, 2147483648
        %v1482 = vor.u32 1.1754944e-38, %v1481
        %v1483 = vsel %vm1480, %v1482, %v1478
        %v1484 = vmul.f32 %v1459, %v1483
        %v1485 = vmin.f32 %v1484, 1.0
        %v1486 = vmax.f32 %v1485, -1.0
        %v1487 = vmul.f32 %v1143, %v1143
        %v1488 = vmin.f32 16.0, %v1487
        %v1489 = vmul.f32 %v1488, 2.1237322e-06
        %v1490 = vadd.f32 %v1489, 0.00028619796
        %v1491 = vmul.f32 %v1488, %v1490
        %v1492 = vadd.f32 %v1491, 0.0036580483
        %v1493 = vmul.f32 %v1488, %v1492
        %v1494 = vadd.f32 %v1493, 0.05243302
        %v1495 = vmul.f32 %v1488, %v1494
        %v1496 = vadd.f32 %v1495, 0.18741608
        %v1497 = vmul.f32 %v1488, %v1496
        %v1498 = vadd.f32 %v1497, 1.1283791
        %v1499 = vmul.f32 %v1143, %v1498
        %v1500 = vmul.f32 %v1488, 3.8918573e-05
        %v1501 = vadd.f32 %v1500, 0.001143296
        %v1502 = vmul.f32 %v1488, %v1501
        %v1503 = vadd.f32 %v1502, 0.014752088
        %v1504 = vmul.f32 %v1488, %v1503
        %v1505 = vadd.f32 %v1504, 0.112945676
        %v1506 = vmul.f32 %v1488, %v1505
        %v1507 = vadd.f32 %v1506, 0.4994258
        %v1508 = vmul.f32 %v1488, %v1507
        %v1509 = vadd.f32 %v1508, 1.0
        %v1510 = vrcp.pop %v1509
        %v1511 = vmul.f32 %v1509, %v1510
        %v1512 = vsub.f32 1.0, %v1511
        %v1513 = vmul.f32 %v1510, %v1512
        %v1514 = vadd.f32 %v1510, %v1513
        %vm1515 = vweird.f32 %v1509
        %vm1516 = vweird.f32 %v1510
        %vm1517 = vmor %vm1515, %vm1516
        %v1518 = vsel %vm1517, %v1510, %v1514
        %v1519 = vand.u32 2147483647, %v1509
        %vm1520 = vcmp.eq.f32.partialorder %v1519, 8.507059e+37
        %v1521 = vand.u32 %v1509, 2147483648
        %v1522 = vor.u32 1.1754944e-38, %v1521
        %v1523 = vsel %vm1520, %v1522, %v1518
        %v1524 = vmul.f32 %v1499, %v1523
        %v1525 = vmin.f32 %v1524, 1.0
        %v1526 = vmax.f32 %v1525, -1.0
        %v1527 = vmul.f32 %v1144, %v1144
        %v1528 = vmin.f32 16.0, %v1527
        %v1529 = vmul.f32 %v1528, 2.1237322e-06
        %v1530 = vadd.f32 %v1529, 0.00028619796
        %v1531 = vmul.f32 %v1528, %v1530
        %v1532 = vadd.f32 %v1531, 0.0036580483
        %v1533 = vmul.f32 %v1528, %v1532
        %v1534 = vadd.f32 %v1533, 0.05243302
        %v1535 = vmul.f32 %v1528, %v1534
        %v1536 = vadd.f32 %v1535, 0.18741608
        %v1537 = vmul.f32 %v1528, %v1536
        %v1538 = vadd.f32 %v1537, 1.1283791
        %v1539 = vmul.f32 %v1144, %v1538
        %v1540 = vmul.f32 %v1528, 3.8918573e-05
        %v1541 = vadd.f32 %v1540, 0.001143296
        %v1542 = vmul.f32 %v1528, %v1541
        %v1543 = vadd.f32 %v1542, 0.014752088
        %v1544 = vmul.f32 %v1528, %v1543
        %v1545 = vadd.f32 %v1544, 0.112945676
        %v1546 = vmul.f32 %v1528, %v1545
        %v1547 = vadd.f32 %v1546, 0.4994258
        %v1548 = vmul.f32 %v1528, %v1547
        %v1549 = vadd.f32 %v1548, 1.0
        %v1550 = vrcp.pop %v1549
        %v1551 = vmul.f32 %v1549, %v1550
        %v1552 = vsub.f32 1.0, %v1551
        %v1553 = vmul.f32 %v1550, %v1552
        %v1554 = vadd.f32 %v1550, %v1553
        %vm1555 = vweird.f32 %v1549
        %vm1556 = vweird.f32 %v1550
        %vm1557 = vmor %vm1555, %vm1556
        %v1558 = vsel %vm1557, %v1550, %v1554
        %v1559 = vand.u32 2147483647, %v1549
        %vm1560 = vcmp.eq.f32.partialorder %v1559, 8.507059e+37
        %v1561 = vand.u32 %v1549, 2147483648
        %v1562 = vor.u32 1.1754944e-38, %v1561
        %v1563 = vsel %vm1560, %v1562, %v1558
        %v1564 = vmul.f32 %v1539, %v1563
        %v1565 = vmin.f32 %v1564, 1.0
        %v1566 = vmax.f32 %v1565, -1.0
        %v1567 = vmul.f32 %v1145, %v1145
        %v1568 = vmin.f32 16.0, %v1567
        %v1569 = vmul.f32 %v1568, 2.1237322e-06
        %v1570 = vadd.f32 %v1569, 0.00028619796
        %v1571 = vmul.f32 %v1568, %v1570
        %v1572 = vadd.f32 %v1571, 0.0036580483
        %v1573 = vmul.f32 %v1568, %v1572
        %v1574 = vadd.f32 %v1573, 0.05243302
        %v1575 = vmul.f32 %v1568, %v1574
        %v1576 = vadd.f32 %v1575, 0.18741608
        %v1577 = vmul.f32 %v1568, %v1576
        %v1578 = vadd.f32 %v1577, 1.1283791
        %v1579 = vmul.f32 %v1145, %v1578
        %v1580 = vmul.f32 %v1568, 3.8918573e-05
        %v1581 = vadd.f32 %v1580, 0.001143296
        %v1582 = vmul.f32 %v1568, %v1581
        %v1583 = vadd.f32 %v1582, 0.014752088
        %v1584 = vmul.f32 %v1568, %v1583
        %v1585 = vadd.f32 %v1584, 0.112945676
        %v1586 = vmul.f32 %v1568, %v1585
        %v1587 = vadd.f32 %v1586, 0.4994258
        %v1588 = vmul.f32 %v1568, %v1587
        %v1589 = vadd.f32 %v1588, 1.0
        %v1590 = vrcp.pop %v1589
        %v1591 = vmul.f32 %v1589, %v1590
        %v1592 = vsub.f32 1.0, %v1591
        %v1593 = vmul.f32 %v1590, %v1592
        %v1594 = vadd.f32 %v1590, %v1593
        %vm1595 = vweird.f32 %v1589
        %vm1596 = vweird.f32 %v1590
        %vm1597 = vmor %vm1595, %vm1596
        %v1598 = vsel %vm1597, %v1590, %v1594
        %v1599 = vand.u32 2147483647, %v1589
        %vm1600 = vcmp.eq.f32.partialorder %v1599, 8.507059e+37
        %v1601 = vand.u32 %v1589, 2147483648
        %v1602 = vor.u32 1.1754944e-38, %v1601
        %v1603 = vsel %vm1600, %v1602, %v1598
        %v1604 = vmul.f32 %v1579, %v1603
        %v1605 = vmin.f32 %v1604, 1.0
        %v1606 = vmax.f32 %v1605, -1.0
        %v1607 = vmul.f32 %v1146, %v1146
        %v1608 = vmin.f32 16.0, %v1607
        %v1609 = vmul.f32 %v1608, 2.1237322e-06
        %v1610 = vadd.f32 %v1609, 0.00028619796
        %v1611 = vmul.f32 %v1608, %v1610
        %v1612 = vadd.f32 %v1611, 0.0036580483
        %v1613 = vmul.f32 %v1608, %v1612
        %v1614 = vadd.f32 %v1613, 0.05243302
        %v1615 = vmul.f32 %v1608, %v1614
        %v1616 = vadd.f32 %v1615, 0.18741608
        %v1617 = vmul.f32 %v1608, %v1616
        %v1618 = vadd.f32 %v1617, 1.1283791
        %v1619 = vmul.f32 %v1146, %v1618
        %v1620 = vmul.f32 %v1608, 3.8918573e-05
        %v1621 = vadd.f32 %v1620, 0.001143296
        %v1622 = vmul.f32 %v1608, %v1621
        %v1623 = vadd.f32 %v1622, 0.014752088
        %v1624 = vmul.f32 %v1608, %v1623
        %v1625 = vadd.f32 %v1624, 0.112945676
        %v1626 = vmul.f32 %v1608, %v1625
        %v1627 = vadd.f32 %v1626, 0.4994258
        %v1628 = vmul.f32 %v1608, %v1627
        %v1629 = vadd.f32 %v1628, 1.0
        %v1630 = vrcp.pop %v1629
        %v1631 = vmul.f32 %v1629, %v1630
        %v1632 = vsub.f32 1.0, %v1631
        %v1633 = vmul.f32 %v1630, %v1632
        %v1634 = vadd.f32 %v1630, %v1633
        %vm1635 = vweird.f32 %v1629
        %vm1636 = vweird.f32 %v1630
        %vm1637 = vmor %vm1635, %vm1636
        %v1638 = vsel %vm1637, %v1630, %v1634
        %v1639 = vand.u32 2147483647, %v1629
        %vm1640 = vcmp.eq.f32.partialorder %v1639, 8.507059e+37
        %v1641 = vand.u32 %v1629, 2147483648
        %v1642 = vor.u32 1.1754944e-38, %v1641
        %v1643 = vsel %vm1640, %v1642, %v1638
        %v1644 = vmul.f32 %v1619, %v1643
        %v1645 = vmin.f32 %v1644, 1.0
        %v1646 = vmax.f32 %v1645, -1.0
        %v1647 = vmul.f32 %v1147, %v1147
        %v1648 = vmin.f32 16.0, %v1647
        %v1649 = vmul.f32 %v1648, 2.1237322e-06
        %v1650 = vadd.f32 %v1649, 0.00028619796
        %v1651 = vmul.f32 %v1648, %v1650
        %v1652 = vadd.f32 %v1651, 0.0036580483
        %v1653 = vmul.f32 %v1648, %v1652
        %v1654 = vadd.f32 %v1653, 0.05243302
        %v1655 = vmul.f32 %v1648, %v1654
        %v1656 = vadd.f32 %v1655, 0.18741608
        %v1657 = vmul.f32 %v1648, %v1656
        %v1658 = vadd.f32 %v1657, 1.1283791
        %v1659 = vmul.f32 %v1147, %v1658
        %v1660 = vmul.f32 %v1648, 3.8918573e-05
        %v1661 = vadd.f32 %v1660, 0.001143296
        %v1662 = vmul.f32 %v1648, %v1661
        %v1663 = vadd.f32 %v1662, 0.014752088
        %v1664 = vmul.f32 %v1648, %v1663
        %v1665 = vadd.f32 %v1664, 0.112945676
        %v1666 = vmul.f32 %v1648, %v1665
        %v1667 = vadd.f32 %v1666, 0.4994258
        %v1668 = vmul.f32 %v1648, %v1667
        %v1669 = vadd.f32 %v1668, 1.0
        %v1670 = vrcp.pop %v1669
        %v1671 = vmul.f32 %v1669, %v1670
        %v1672 = vsub.f32 1.0, %v1671
        %v1673 = vmul.f32 %v1670, %v1672
        %v1674 = vadd.f32 %v1670, %v1673
        %vm1675 = vweird.f32 %v1669
        %vm1676 = vweird.f32 %v1670
        %vm1677 = vmor %vm1675, %vm1676
        %v1678 = vsel %vm1677, %v1670, %v1674
        %v1679 = vand.u32 2147483647, %v1669
        %vm1680 = vcmp.eq.f32.partialorder %v1679, 8.507059e+37
        %v1681 = vand.u32 %v1669, 2147483648
        %v1682 = vor.u32 1.1754944e-38, %v1681
        %v1683 = vsel %vm1680, %v1682, %v1678
        %v1684 = vmul.f32 %v1659, %v1683
        %v1685 = vmin.f32 %v1684, 1.0
        %v1686 = vmax.f32 %v1685, -1.0
        %v1687 = vmul.f32 %v1148, %v1148
        %v1688 = vmin.f32 16.0, %v1687
        %v1689 = vmul.f32 %v1688, 2.1237322e-06
        %v1690 = vadd.f32 %v1689, 0.00028619796
        %v1691 = vmul.f32 %v1688, %v1690
        %v1692 = vadd.f32 %v1691, 0.0036580483
        %v1693 = vmul.f32 %v1688, %v1692
        %v1694 = vadd.f32 %v1693, 0.05243302
        %v1695 = vmul.f32 %v1688, %v1694
        %v1696 = vadd.f32 %v1695, 0.18741608
        %v1697 = vmul.f32 %v1688, %v1696
        %v1698 = vadd.f32 %v1697, 1.1283791
        %v1699 = vmul.f32 %v1148, %v1698
        %v1700 = vmul.f32 %v1688, 3.8918573e-05
        %v1701 = vadd.f32 %v1700, 0.001143296
        %v1702 = vmul.f32 %v1688, %v1701
        %v1703 = vadd.f32 %v1702, 0.014752088
        %v1704 = vmul.f32 %v1688, %v1703
        %v1705 = vadd.f32 %v1704, 0.112945676
        %v1706 = vmul.f32 %v1688, %v1705
        %v1707 = vadd.f32 %v1706, 0.4994258
        %v1708 = vmul.f32 %v1688, %v1707
        %v1709 = vadd.f32 %v1708, 1.0
        %v1710 = vrcp.pop %v1709
        %v1711 = vmul.f32 %v1709, %v1710
        %v1712 = vsub.f32 1.0, %v1711
        %v1713 = vmul.f32 %v1710, %v1712
        %v1714 = vadd.f32 %v1710, %v1713
        %vm1715 = vweird.f32 %v1709
        %vm1716 = vweird.f32 %v1710
        %vm1717 = vmor %vm1715, %vm1716
        %v1718 = vsel %vm1717, %v1710, %v1714
        %v1719 = vand.u32 2147483647, %v1709
        %vm1720 = vcmp.eq.f32.partialorder %v1719, 8.507059e+37
        %v1721 = vand.u32 %v1709, 2147483648
        %v1722 = vor.u32 1.1754944e-38, %v1721
        %v1723 = vsel %vm1720, %v1722, %v1718
        %v1724 = vmul.f32 %v1699, %v1723
        %v1725 = vmin.f32 %v1724, 1.0
        %v1726 = vmax.f32 %v1725, -1.0
        %v1727 = vmul.f32 %v1149, %v1149
        %v1728 = vmin.f32 16.0, %v1727
        %v1729 = vmul.f32 %v1728, 2.1237322e-06
        %v1730 = vadd.f32 %v1729, 0.00028619796
        %v1731 = vmul.f32 %v1728, %v1730
        %v1732 = vadd.f32 %v1731, 0.0036580483
        %v1733 = vmul.f32 %v1728, %v1732
        %v1734 = vadd.f32 %v1733, 0.05243302
        %v1735 = vmul.f32 %v1728, %v1734
        %v1736 = vadd.f32 %v1735, 0.18741608
        %v1737 = vmul.f32 %v1728, %v1736
        %v1738 = vadd.f32 %v1737, 1.1283791
        %v1739 = vmul.f32 %v1149, %v1738
        %v1740 = vmul.f32 %v1728, 3.8918573e-05
        %v1741 = vadd.f32 %v1740, 0.001143296
        %v1742 = vmul.f32 %v1728, %v1741
        %v1743 = vadd.f32 %v1742, 0.014752088
        %v1744 = vmul.f32 %v1728, %v1743
        %v1745 = vadd.f32 %v1744, 0.112945676
        %v1746 = vmul.f32 %v1728, %v1745
        %v1747 = vadd.f32 %v1746, 0.4994258
        %v1748 = vmul.f32 %v1728, %v1747
        %v1749 = vadd.f32 %v1748, 1.0
        %v1750 = vrcp.pop %v1749
        %v1751 = vmul.f32 %v1749, %v1750
        %v1752 = vsub.f32 1.0, %v1751
        %v1753 = vmul.f32 %v1750, %v1752
        %v1754 = vadd.f32 %v1750, %v1753
        %vm1755 = vweird.f32 %v1749
        %vm1756 = vweird.f32 %v1750
        %vm1757 = vmor %vm1755, %vm1756
        %v1758 = vsel %vm1757, %v1750, %v1754
        %v1759 = vand.u32 2147483647, %v1749
        %vm1760 = vcmp.eq.f32.partialorder %v1759, 8.507059e+37
        %v1761 = vand.u32 %v1749, 2147483648
        %v1762 = vor.u32 1.1754944e-38, %v1761
        %v1763 = vsel %vm1760, %v1762, %v1758
        %v1764 = vmul.f32 %v1739, %v1763
        %v1765 = vmin.f32 %v1764, 1.0
        %v1766 = vmax.f32 %v1765, -1.0
        %v1767 = vmul.f32 %v1150, %v1150
        %v1768 = vmin.f32 16.0, %v1767
        %v1769 = vmul.f32 %v1768, 2.1237322e-06
        %v1770 = vadd.f32 %v1769, 0.00028619796
        %v1771 = vmul.f32 %v1768, %v1770
        %v1772 = vadd.f32 %v1771, 0.0036580483
        %v1773 = vmul.f32 %v1768, %v1772
        %v1774 = vadd.f32 %v1773, 0.05243302
        %v1775 = vmul.f32 %v1768, %v1774
        %v1776 = vadd.f32 %v1775, 0.18741608
        %v1777 = vmul.f32 %v1768, %v1776
        %v1778 = vadd.f32 %v1777, 1.1283791
        %v1779 = vmul.f32 %v1150, %v1778
        %v1780 = vmul.f32 %v1768, 3.8918573e-05
        %v1781 = vadd.f32 %v1780, 0.001143296
        %v1782 = vmul.f32 %v1768, %v1781
        %v1783 = vadd.f32 %v1782, 0.014752088
        %v1784 = vmul.f32 %v1768, %v1783
        %v1785 = vadd.f32 %v1784, 0.112945676
        %v1786 = vmul.f32 %v1768, %v1785
        %v1787 = vadd.f32 %v1786, 0.4994258
        %v1788 = vmul.f32 %v1768, %v1787
        %v1789 = vadd.f32 %v1788, 1.0
        %v1790 = vrcp.pop %v1789
        %v1791 = vmul.f32 %v1789, %v1790
        %v1792 = vsub.f32 1.0, %v1791
        %v1793 = vmul.f32 %v1790, %v1792
        %v1794 = vadd.f32 %v1790, %v1793
        %vm1795 = vweird.f32 %v1789
        %vm1796 = vweird.f32 %v1790
        %vm1797 = vmor %vm1795, %vm1796
        %v1798 = vsel %vm1797, %v1790, %v1794
        %v1799 = vand.u32 2147483647, %v1789
        %vm1800 = vcmp.eq.f32.partialorder %v1799, 8.507059e+37
        %v1801 = vand.u32 %v1789, 2147483648
        %v1802 = vor.u32 1.1754944e-38, %v1801
        %v1803 = vsel %vm1800, %v1802, %v1798
        %v1804 = vmul.f32 %v1779, %v1803
        %v1805 = vmin.f32 %v1804, 1.0
        %v1806 = vmax.f32 %v1805, -1.0
        %v1807 = vmul.f32 %v1151, %v1151
        %v1808 = vmin.f32 16.0, %v1807
        %v1809 = vmul.f32 %v1808, 2.1237322e-06
        %v1810 = vadd.f32 %v1809, 0.00028619796
        %v1811 = vmul.f32 %v1808, %v1810
        %v1812 = vadd.f32 %v1811, 0.0036580483
        %v1813 = vmul.f32 %v1808, %v1812
        %v1814 = vadd.f32 %v1813, 0.05243302
        %v1815 = vmul.f32 %v1808, %v1814
        %v1816 = vadd.f32 %v1815, 0.18741608
        %v1817 = vmul.f32 %v1808, %v1816
        %v1818 = vadd.f32 %v1817, 1.1283791
        %v1819 = vmul.f32 %v1151, %v1818
        %v1820 = vmul.f32 %v1808, 3.8918573e-05
        %v1821 = vadd.f32 %v1820, 0.001143296
        %v1822 = vmul.f32 %v1808, %v1821
        %v1823 = vadd.f32 %v1822, 0.014752088
        %v1824 = vmul.f32 %v1808, %v1823
        %v1825 = vadd.f32 %v1824, 0.112945676
        %v1826 = vmul.f32 %v1808, %v1825
        %v1827 = vadd.f32 %v1826, 0.4994258
        %v1828 = vmul.f32 %v1808, %v1827
        %v1829 = vadd.f32 %v1828, 1.0
        %v1830 = vrcp.pop %v1829
        %v1831 = vmul.f32 %v1829, %v1830
        %v1832 = vsub.f32 1.0, %v1831
        %v1833 = vmul.f32 %v1830, %v1832
        %v1834 = vadd.f32 %v1830, %v1833
        %vm1835 = vweird.f32 %v1829
        %vm1836 = vweird.f32 %v1830
        %vm1837 = vmor %vm1835, %vm1836
        %v1838 = vsel %vm1837, %v1830, %v1834
        %v1839 = vand.u32 2147483647, %v1829
        %vm1840 = vcmp.eq.f32.partialorder %v1839, 8.507059e+37
        %v1841 = vand.u32 %v1829, 2147483648
        %v1842 = vor.u32 1.1754944e-38, %v1841
        %v1843 = vsel %vm1840, %v1842, %v1838
        %v1844 = vmul.f32 %v1819, %v1843
        %v1845 = vmin.f32 %v1844, 1.0
        %v1846 = vmax.f32 %v1845, -1.0
        %v1847 = vmul.f32 %v1152, %v1152
        %v1848 = vmin.f32 16.0, %v1847
        %v1849 = vmul.f32 %v1848, 2.1237322e-06
        %v1850 = vadd.f32 %v1849, 0.00028619796
        %v1851 = vmul.f32 %v1848, %v1850
        %v1852 = vadd.f32 %v1851, 0.0036580483
        %v1853 = vmul.f32 %v1848, %v1852
        %v1854 = vadd.f32 %v1853, 0.05243302
        %v1855 = vmul.f32 %v1848, %v1854
        %v1856 = vadd.f32 %v1855, 0.18741608
        %v1857 = vmul.f32 %v1848, %v1856
        %v1858 = vadd.f32 %v1857, 1.1283791
        %v1859 = vmul.f32 %v1152, %v1858
        %v1860 = vmul.f32 %v1848, 3.8918573e-05
        %v1861 = vadd.f32 %v1860, 0.001143296
        %v1862 = vmul.f32 %v1848, %v1861
        %v1863 = vadd.f32 %v1862, 0.014752088
        %v1864 = vmul.f32 %v1848, %v1863
        %v1865 = vadd.f32 %v1864, 0.112945676
        %v1866 = vmul.f32 %v1848, %v1865
        %v1867 = vadd.f32 %v1866, 0.4994258
        %v1868 = vmul.f32 %v1848, %v1867
        %v1869 = vadd.f32 %v1868, 1.0
        %v1870 = vrcp.pop %v1869
        %v1871 = vmul.f32 %v1869, %v1870
        %v1872 = vsub.f32 1.0, %v1871
        %v1873 = vmul.f32 %v1870, %v1872
        %v1874 = vadd.f32 %v1870, %v1873
        %vm1875 = vweird.f32 %v1869
        %vm1876 = vweird.f32 %v1870
        %vm1877 = vmor %vm1875, %vm1876
        %v1878 = vsel %vm1877, %v1870, %v1874
        %v1879 = vand.u32 2147483647, %v1869
        %vm1880 = vcmp.eq.f32.partialorder %v1879, 8.507059e+37
        %v1881 = vand.u32 %v1869, 2147483648
        %v1882 = vor.u32 1.1754944e-38, %v1881
        %v1883 = vsel %vm1880, %v1882, %v1878
        %v1884 = vmul.f32 %v1859, %v1883
        %v1885 = vmin.f32 %v1884, 1.0
        %v1886 = vmax.f32 %v1885, -1.0
        %v1887 = vmul.f32 %v1153, %v1153
        %v1888 = vmin.f32 16.0, %v1887
        %v1889 = vmul.f32 %v1888, 2.1237322e-06
        %v1890 = vadd.f32 %v1889, 0.00028619796
        %v1891 = vmul.f32 %v1888, %v1890
        %v1892 = vadd.f32 %v1891, 0.0036580483
        %v1893 = vmul.f32 %v1888, %v1892
        %v1894 = vadd.f32 %v1893, 0.05243302
        %v1895 = vmul.f32 %v1888, %v1894
        %v1896 = vadd.f32 %v1895, 0.18741608
        %v1897 = vmul.f32 %v1888, %v1896
        %v1898 = vadd.f32 %v1897, 1.1283791
        %v1899 = vmul.f32 %v1153, %v1898
        %v1900 = vmul.f32 %v1888, 3.8918573e-05
        %v1901 = vadd.f32 %v1900, 0.001143296
        %v1902 = vmul.f32 %v1888, %v1901
        %v1903 = vadd.f32 %v1902, 0.014752088
        %v1904 = vmul.f32 %v1888, %v1903
        %v1905 = vadd.f32 %v1904, 0.112945676
        %v1906 = vmul.f32 %v1888, %v1905
        %v1907 = vadd.f32 %v1906, 0.4994258
        %v1908 = vmul.f32 %v1888, %v1907
        %v1909 = vadd.f32 %v1908, 1.0
        %v1910 = vrcp.pop %v1909
        %v1911 = vmul.f32 %v1909, %v1910
        %v1912 = vsub.f32 1.0, %v1911
        %v1913 = vmul.f32 %v1910, %v1912
        %v1914 = vadd.f32 %v1910, %v1913
        %vm1915 = vweird.f32 %v1909
        %vm1916 = vweird.f32 %v1910
        %vm1917 = vmor %vm1915, %vm1916
        %v1918 = vsel %vm1917, %v1910, %v1914
        %v1919 = vand.u32 2147483647, %v1909
        %vm1920 = vcmp.eq.f32.partialorder %v1919, 8.507059e+37
        %v1921 = vand.u32 %v1909, 2147483648
        %v1922 = vor.u32 1.1754944e-38, %v1921
        %v1923 = vsel %vm1920, %v1922, %v1918
        %v1924 = vmul.f32 %v1899, %v1923
        %v1925 = vmin.f32 %v1924, 1.0
        %v1926 = vmax.f32 %v1925, -1.0
        %v1927 = vmul.f32 %v1154, %v1154
        %v1928 = vmin.f32 16.0, %v1927
        %v1929 = vmul.f32 %v1928, 2.1237322e-06
        %v1930 = vadd.f32 %v1929, 0.00028619796
        %v1931 = vmul.f32 %v1928, %v1930
        %v1932 = vadd.f32 %v1931, 0.0036580483
        %v1933 = vmul.f32 %v1928, %v1932
        %v1934 = vadd.f32 %v1933, 0.05243302
        %v1935 = vmul.f32 %v1928, %v1934
        %v1936 = vadd.f32 %v1935, 0.18741608
        %v1937 = vmul.f32 %v1928, %v1936
        %v1938 = vadd.f32 %v1937, 1.1283791
        %v1939 = vmul.f32 %v1154, %v1938
        %v1940 = vmul.f32 %v1928, 3.8918573e-05
        %v1941 = vadd.f32 %v1940, 0.001143296
        %v1942 = vmul.f32 %v1928, %v1941
        %v1943 = vadd.f32 %v1942, 0.014752088
        %v1944 = vmul.f32 %v1928, %v1943
        %v1945 = vadd.f32 %v1944, 0.112945676
        %v1946 = vmul.f32 %v1928, %v1945
        %v1947 = vadd.f32 %v1946, 0.4994258
        %v1948 = vmul.f32 %v1928, %v1947
        %v1949 = vadd.f32 %v1948, 1.0
        %v1950 = vrcp.pop %v1949
        %v1951 = vmul.f32 %v1949, %v1950
        %v1952 = vsub.f32 1.0, %v1951
        %v1953 = vmul.f32 %v1950, %v1952
        %v1954 = vadd.f32 %v1950, %v1953
        %vm1955 = vweird.f32 %v1949
        %vm1956 = vweird.f32 %v1950
        %vm1957 = vmor %vm1955, %vm1956
        %v1958 = vsel %vm1957, %v1950, %v1954
        %v1959 = vand.u32 2147483647, %v1949
        %vm1960 = vcmp.eq.f32.partialorder %v1959, 8.507059e+37
        %v1961 = vand.u32 %v1949, 2147483648
        %v1962 = vor.u32 1.1754944e-38, %v1961
        %v1963 = vsel %vm1960, %v1962, %v1958
        %v1964 = vmul.f32 %v1939, %v1963
        %v1965 = vmin.f32 %v1964, 1.0
        %v1966 = vmax.f32 %v1965, -1.0
        %v1967 = vmul.f32 %v1155, %v1155
        %v1968 = vmin.f32 16.0, %v1967
        %v1969 = vmul.f32 %v1968, 2.1237322e-06
        %v1970 = vadd.f32 %v1969, 0.00028619796
        %v1971 = vmul.f32 %v1968, %v1970
        %v1972 = vadd.f32 %v1971, 0.0036580483
        %v1973 = vmul.f32 %v1968, %v1972
        %v1974 = vadd.f32 %v1973, 0.05243302
        %v1975 = vmul.f32 %v1968, %v1974
        %v1976 = vadd.f32 %v1975, 0.18741608
        %v1977 = vmul.f32 %v1968, %v1976
        %v1978 = vadd.f32 %v1977, 1.1283791
        %v1979 = vmul.f32 %v1155, %v1978
        %v1980 = vmul.f32 %v1968, 3.8918573e-05
        %v1981 = vadd.f32 %v1980, 0.001143296
        %v1982 = vmul.f32 %v1968, %v1981
        %v1983 = vadd.f32 %v1982, 0.014752088
        %v1984 = vmul.f32 %v1968, %v1983
        %v1985 = vadd.f32 %v1984, 0.112945676
        %v1986 = vmul.f32 %v1968, %v1985
        %v1987 = vadd.f32 %v1986, 0.4994258
        %v1988 = vmul.f32 %v1968, %v1987
        %v1989 = vadd.f32 %v1988, 1.0
        %v1990 = vrcp.pop %v1989
        %v1991 = vmul.f32 %v1989, %v1990
        %v1992 = vsub.f32 1.0, %v1991
        %v1993 = vmul.f32 %v1990, %v1992
        %v1994 = vadd.f32 %v1990, %v1993
        %vm1995 = vweird.f32 %v1989
        %vm1996 = vweird.f32 %v1990
        %vm1997 = vmor %vm1995, %vm1996
        %v1998 = vsel %vm1997, %v1990, %v1994
        %v1999 = vand.u32 2147483647, %v1989
        %vm2000 = vcmp.eq.f32.partialorder %v1999, 8.507059e+37
        %v2001 = vand.u32 %v1989, 2147483648
        %v2002 = vor.u32 1.1754944e-38, %v2001
        %v2003 = vsel %vm2000, %v2002, %v1998
        %v2004 = vmul.f32 %v1979, %v2003
        %v2005 = vmin.f32 %v2004, 1.0
        %v2006 = vmax.f32 %v2005, -1.0
        %v2007 = vmul.f32 %v1156, %v1156
        %v2008 = vmin.f32 16.0, %v2007
        %v2009 = vmul.f32 %v2008, 2.1237322e-06
        %v2010 = vadd.f32 %v2009, 0.00028619796
        %v2011 = vmul.f32 %v2008, %v2010
        %v2012 = vadd.f32 %v2011, 0.0036580483
        %v2013 = vmul.f32 %v2008, %v2012
        %v2014 = vadd.f32 %v2013, 0.05243302
        %v2015 = vmul.f32 %v2008, %v2014
        %v2016 = vadd.f32 %v2015, 0.18741608
        %v2017 = vmul.f32 %v2008, %v2016
        %v2018 = vadd.f32 %v2017, 1.1283791
        %v2019 = vmul.f32 %v1156, %v2018
        %v2020 = vmul.f32 %v2008, 3.8918573e-05
        %v2021 = vadd.f32 %v2020, 0.001143296
        %v2022 = vmul.f32 %v2008, %v2021
        %v2023 = vadd.f32 %v2022, 0.014752088
        %v2024 = vmul.f32 %v2008, %v2023
        %v2025 = vadd.f32 %v2024, 0.112945676
        %v2026 = vmul.f32 %v2008, %v2025
        %v2027 = vadd.f32 %v2026, 0.4994258
        %v2028 = vmul.f32 %v2008, %v2027
        %v2029 = vadd.f32 %v2028, 1.0
        %v2030 = vrcp.pop %v2029
        %v2031 = vmul.f32 %v2029, %v2030
        %v2032 = vsub.f32 1.0, %v2031
        %v2033 = vmul.f32 %v2030, %v2032
        %v2034 = vadd.f32 %v2030, %v2033
        %vm2035 = vweird.f32 %v2029
        %vm2036 = vweird.f32 %v2030
        %vm2037 = vmor %vm2035, %vm2036
        %v2038 = vsel %vm2037, %v2030, %v2034
        %v2039 = vand.u32 2147483647, %v2029
        %vm2040 = vcmp.eq.f32.partialorder %v2039, 8.507059e+37
        %v2041 = vand.u32 %v2029, 2147483648
        %v2042 = vor.u32 1.1754944e-38, %v2041
        %v2043 = vsel %vm2040, %v2042, %v2038
        %v2044 = vmul.f32 %v2019, %v2043
        %v2045 = vmin.f32 %v2044, 1.0
        %v2046 = vmax.f32 %v2045, -1.0
        %v2047 = vmul.f32 %v1157, %v1157
        %v2048 = vmin.f32 16.0, %v2047
        %v2049 = vmul.f32 %v2048, 2.1237322e-06
        %v2050 = vadd.f32 %v2049, 0.00028619796
        %v2051 = vmul.f32 %v2048, %v2050
        %v2052 = vadd.f32 %v2051, 0.0036580483
        %v2053 = vmul.f32 %v2048, %v2052
        %v2054 = vadd.f32 %v2053, 0.05243302
        %v2055 = vmul.f32 %v2048, %v2054
        %v2056 = vadd.f32 %v2055, 0.18741608
        %v2057 = vmul.f32 %v2048, %v2056
        %v2058 = vadd.f32 %v2057, 1.1283791
        %v2059 = vmul.f32 %v1157, %v2058
        %v2060 = vmul.f32 %v2048, 3.8918573e-05
        %v2061 = vadd.f32 %v2060, 0.001143296
        %v2062 = vmul.f32 %v2048, %v2061
        %v2063 = vadd.f32 %v2062, 0.014752088
        %v2064 = vmul.f32 %v2048, %v2063
        %v2065 = vadd.f32 %v2064, 0.112945676
        %v2066 = vmul.f32 %v2048, %v2065
        %v2067 = vadd.f32 %v2066, 0.4994258
        %v2068 = vmul.f32 %v2048, %v2067
        %v2069 = vadd.f32 %v2068, 1.0
        %v2070 = vrcp.pop %v2069
        %v2071 = vmul.f32 %v2069, %v2070
        %v2072 = vsub.f32 1.0, %v2071
        %v2073 = vmul.f32 %v2070, %v2072
        %v2074 = vadd.f32 %v2070, %v2073
        %vm2075 = vweird.f32 %v2069
        %vm2076 = vweird.f32 %v2070
        %vm2077 = vmor %vm2075, %vm2076
        %v2078 = vsel %vm2077, %v2070, %v2074
        %v2079 = vand.u32 2147483647, %v2069
        %vm2080 = vcmp.eq.f32.partialorder %v2079, 8.507059e+37
        %v2081 = vand.u32 %v2069, 2147483648
        %v2082 = vor.u32 1.1754944e-38, %v2081
        %v2083 = vsel %vm2080, %v2082, %v2078
        %v2084 = vmul.f32 %v2059, %v2083
        %v2085 = vmin.f32 %v2084, 1.0
        %v2086 = vmax.f32 %v2085, -1.0
        %v2087 = vmul.f32 %v1158, %v1158
        %v2088 = vmin.f32 16.0, %v2087
        %v2089 = vmul.f32 %v2088, 2.1237322e-06
        %v2090 = vadd.f32 %v2089, 0.00028619796
        %v2091 = vmul.f32 %v2088, %v2090
        %v2092 = vadd.f32 %v2091, 0.0036580483
        %v2093 = vmul.f32 %v2088, %v2092
        %v2094 = vadd.f32 %v2093, 0.05243302
        %v2095 = vmul.f32 %v2088, %v2094
        %v2096 = vadd.f32 %v2095, 0.18741608
        %v2097 = vmul.f32 %v2088, %v2096
        %v2098 = vadd.f32 %v2097, 1.1283791
        %v2099 = vmul.f32 %v1158, %v2098
        %v2100 = vmul.f32 %v2088, 3.8918573e-05
        %v2101 = vadd.f32 %v2100, 0.001143296
        %v2102 = vmul.f32 %v2088, %v2101
        %v2103 = vadd.f32 %v2102, 0.014752088
        %v2104 = vmul.f32 %v2088, %v2103
        %v2105 = vadd.f32 %v2104, 0.112945676
        %v2106 = vmul.f32 %v2088, %v2105
        %v2107 = vadd.f32 %v2106, 0.4994258
        %v2108 = vmul.f32 %v2088, %v2107
        %v2109 = vadd.f32 %v2108, 1.0
        %v2110 = vrcp.pop %v2109
        %v2111 = vmul.f32 %v2109, %v2110
        %v2112 = vsub.f32 1.0, %v2111
        %v2113 = vmul.f32 %v2110, %v2112
        %v2114 = vadd.f32 %v2110, %v2113
        %vm2115 = vweird.f32 %v2109
        %vm2116 = vweird.f32 %v2110
        %vm2117 = vmor %vm2115, %vm2116
        %v2118 = vsel %vm2117, %v2110, %v2114
        %v2119 = vand.u32 2147483647, %v2109
        %vm2120 = vcmp.eq.f32.partialorder %v2119, 8.507059e+37
        %v2121 = vand.u32 %v2109, 2147483648
        %v2122 = vor.u32 1.1754944e-38, %v2121
        %v2123 = vsel %vm2120, %v2122, %v2118
        %v2124 = vmul.f32 %v2099, %v2123
        %v2125 = vmin.f32 %v2124, 1.0
        %v2126 = vmax.f32 %v2125, -1.0
        %v2127 = vmul.f32 %v1159, %v1159
        %v2128 = vmin.f32 16.0, %v2127
        %v2129 = vmul.f32 %v2128, 2.1237322e-06
        %v2130 = vadd.f32 %v2129, 0.00028619796
        %v2131 = vmul.f32 %v2128, %v2130
        %v2132 = vadd.f32 %v2131, 0.0036580483
        %v2133 = vmul.f32 %v2128, %v2132
        %v2134 = vadd.f32 %v2133, 0.05243302
        %v2135 = vmul.f32 %v2128, %v2134
        %v2136 = vadd.f32 %v2135, 0.18741608
        %v2137 = vmul.f32 %v2128, %v2136
        %v2138 = vadd.f32 %v2137, 1.1283791
        %v2139 = vmul.f32 %v1159, %v2138
        %v2140 = vmul.f32 %v2128, 3.8918573e-05
        %v2141 = vadd.f32 %v2140, 0.001143296
        %v2142 = vmul.f32 %v2128, %v2141
        %v2143 = vadd.f32 %v2142, 0.014752088
        %v2144 = vmul.f32 %v2128, %v2143
        %v2145 = vadd.f32 %v2144, 0.112945676
        %v2146 = vmul.f32 %v2128, %v2145
        %v2147 = vadd.f32 %v2146, 0.4994258
        %v2148 = vmul.f32 %v2128, %v2147
        %v2149 = vadd.f32 %v2148, 1.0
        %v2150 = vrcp.pop %v2149
        %v2151 = vmul.f32 %v2149, %v2150
        %v2152 = vsub.f32 1.0, %v2151
        %v2153 = vmul.f32 %v2150, %v2152
        %v2154 = vadd.f32 %v2150, %v2153
        %vm2155 = vweird.f32 %v2149
        %vm2156 = vweird.f32 %v2150
        %vm2157 = vmor %vm2155, %vm2156
        %v2158 = vsel %vm2157, %v2150, %v2154
        %v2159 = vand.u32 2147483647, %v2149
        %vm2160 = vcmp.eq.f32.partialorder %v2159, 8.507059e+37
        %v2161 = vand.u32 %v2149, 2147483648
        %v2162 = vor.u32 1.1754944e-38, %v2161
        %v2163 = vsel %vm2160, %v2162, %v2158
        %v2164 = vmul.f32 %v2139, %v2163
        %v2165 = vmin.f32 %v2164, 1.0
        %v2166 = vmax.f32 %v2165, -1.0
        %v2167 = vmul.f32 %v1160, %v1160
        %v2168 = vmin.f32 16.0, %v2167
        %v2169 = vmul.f32 %v2168, 2.1237322e-06
        %v2170 = vadd.f32 %v2169, 0.00028619796
        %v2171 = vmul.f32 %v2168, %v2170
        %v2172 = vadd.f32 %v2171, 0.0036580483
        %v2173 = vmul.f32 %v2168, %v2172
        %v2174 = vadd.f32 %v2173, 0.05243302
        %v2175 = vmul.f32 %v2168, %v2174
        %v2176 = vadd.f32 %v2175, 0.18741608
        %v2177 = vmul.f32 %v2168, %v2176
        %v2178 = vadd.f32 %v2177, 1.1283791
        %v2179 = vmul.f32 %v1160, %v2178
        %v2180 = vmul.f32 %v2168, 3.8918573e-05
        %v2181 = vadd.f32 %v2180, 0.001143296
        %v2182 = vmul.f32 %v2168, %v2181
        %v2183 = vadd.f32 %v2182, 0.014752088
        %v2184 = vmul.f32 %v2168, %v2183
        %v2185 = vadd.f32 %v2184, 0.112945676
        %v2186 = vmul.f32 %v2168, %v2185
        %v2187 = vadd.f32 %v2186, 0.4994258
        %v2188 = vmul.f32 %v2168, %v2187
        %v2189 = vadd.f32 %v2188, 1.0
        %v2190 = vrcp.pop %v2189
        %v2191 = vmul.f32 %v2189, %v2190
        %v2192 = vsub.f32 1.0, %v2191
        %v2193 = vmul.f32 %v2190, %v2192
        %v2194 = vadd.f32 %v2190, %v2193
        %vm2195 = vweird.f32 %v2189
        %vm2196 = vweird.f32 %v2190
        %vm2197 = vmor %vm2195, %vm2196
        %v2198 = vsel %vm2197, %v2190, %v2194
        %v2199 = vand.u32 2147483647, %v2189
        %vm2200 = vcmp.eq.f32.partialorder %v2199, 8.507059e+37
        %v2201 = vand.u32 %v2189, 2147483648
        %v2202 = vor.u32 1.1754944e-38, %v2201
        %v2203 = vsel %vm2200, %v2202, %v2198
        %v2204 = vmul.f32 %v2179, %v2203
        %v2205 = vmin.f32 %v2204, 1.0
        %v2206 = vmax.f32 %v2205, -1.0
        %v2207 = vmul.f32 %v1161, %v1161
        %v2208 = vmin.f32 16.0, %v2207
        %v2209 = vmul.f32 %v2208, 2.1237322e-06
        %v2210 = vadd.f32 %v2209, 0.00028619796
        %v2211 = vmul.f32 %v2208, %v2210
        %v2212 = vadd.f32 %v2211, 0.0036580483
        %v2213 = vmul.f32 %v2208, %v2212
        %v2214 = vadd.f32 %v2213, 0.05243302
        %v2215 = vmul.f32 %v2208, %v2214
        %v2216 = vadd.f32 %v2215, 0.18741608
        %v2217 = vmul.f32 %v2208, %v2216
        %v2218 = vadd.f32 %v2217, 1.1283791
        %v2219 = vmul.f32 %v1161, %v2218
        %v2220 = vmul.f32 %v2208, 3.8918573e-05
        %v2221 = vadd.f32 %v2220, 0.001143296
        %v2222 = vmul.f32 %v2208, %v2221
        %v2223 = vadd.f32 %v2222, 0.014752088
        %v2224 = vmul.f32 %v2208, %v2223
        %v2225 = vadd.f32 %v2224, 0.112945676
        %v2226 = vmul.f32 %v2208, %v2225
        %v2227 = vadd.f32 %v2226, 0.4994258
        %v2228 = vmul.f32 %v2208, %v2227
        %v2229 = vadd.f32 %v2228, 1.0
        %v2230 = vrcp.pop %v2229
        %v2231 = vmul.f32 %v2229, %v2230
        %v2232 = vsub.f32 1.0, %v2231
        %v2233 = vmul.f32 %v2230, %v2232
        %v2234 = vadd.f32 %v2230, %v2233
        %vm2235 = vweird.f32 %v2229
        %vm2236 = vweird.f32 %v2230
        %vm2237 = vmor %vm2235, %vm2236
        %v2238 = vsel %vm2237, %v2230, %v2234
        %v2239 = vand.u32 2147483647, %v2229
        %vm2240 = vcmp.eq.f32.partialorder %v2239, 8.507059e+37
        %v2241 = vand.u32 %v2229, 2147483648
        %v2242 = vor.u32 1.1754944e-38, %v2241
        %v2243 = vsel %vm2240, %v2242, %v2238
        %v2244 = vmul.f32 %v2219, %v2243
        %v2245 = vmin.f32 %v2244, 1.0
        %v2246 = vmax.f32 %v2245, -1.0
        %v2247 = vmul.f32 %v1162, %v1162
        %v2248 = vmin.f32 16.0, %v2247
        %v2249 = vmul.f32 %v2248, 2.1237322e-06
        %v2250 = vadd.f32 %v2249, 0.00028619796
        %v2251 = vmul.f32 %v2248, %v2250
        %v2252 = vadd.f32 %v2251, 0.0036580483
        %v2253 = vmul.f32 %v2248, %v2252
        %v2254 = vadd.f32 %v2253, 0.05243302
        %v2255 = vmul.f32 %v2248, %v2254
        %v2256 = vadd.f32 %v2255, 0.18741608
        %v2257 = vmul.f32 %v2248, %v2256
        %v2258 = vadd.f32 %v2257, 1.1283791
        %v2259 = vmul.f32 %v1162, %v2258
        %v2260 = vmul.f32 %v2248, 3.8918573e-05
        %v2261 = vadd.f32 %v2260, 0.001143296
        %v2262 = vmul.f32 %v2248, %v2261
        %v2263 = vadd.f32 %v2262, 0.014752088
        %v2264 = vmul.f32 %v2248, %v2263
        %v2265 = vadd.f32 %v2264, 0.112945676
        %v2266 = vmul.f32 %v2248, %v2265
        %v2267 = vadd.f32 %v2266, 0.4994258
        %v2268 = vmul.f32 %v2248, %v2267
        %v2269 = vadd.f32 %v2268, 1.0
        %v2270 = vrcp.pop %v2269
        %v2271 = vmul.f32 %v2269, %v2270
        %v2272 = vsub.f32 1.0, %v2271
        %v2273 = vmul.f32 %v2270, %v2272
        %v2274 = vadd.f32 %v2270, %v2273
        %vm2275 = vweird.f32 %v2269
        %vm2276 = vweird.f32 %v2270
        %vm2277 = vmor %vm2275, %vm2276
        %v2278 = vsel %vm2277, %v2270, %v2274
        %v2279 = vand.u32 2147483647, %v2269
        %vm2280 = vcmp.eq.f32.partialorder %v2279, 8.507059e+37
        %v2281 = vand.u32 %v2269, 2147483648
        %v2282 = vor.u32 1.1754944e-38, %v2281
        %v2283 = vsel %vm2280, %v2282, %v2278
        %v2284 = vmul.f32 %v2259, %v2283
        %v2285 = vmin.f32 %v2284, 1.0
        %v2286 = vmax.f32 %v2285, -1.0
        %v2287 = vmul.f32 %v1163, %v1163
        %v2288 = vmin.f32 16.0, %v2287
        %v2289 = vmul.f32 %v2288, 2.1237322e-06
        %v2290 = vadd.f32 %v2289, 0.00028619796
        %v2291 = vmul.f32 %v2288, %v2290
        %v2292 = vadd.f32 %v2291, 0.0036580483
        %v2293 = vmul.f32 %v2288, %v2292
        %v2294 = vadd.f32 %v2293, 0.05243302
        %v2295 = vmul.f32 %v2288, %v2294
        %v2296 = vadd.f32 %v2295, 0.18741608
        %v2297 = vmul.f32 %v2288, %v2296
        %v2298 = vadd.f32 %v2297, 1.1283791
        %v2299 = vmul.f32 %v1163, %v2298
        %v2300 = vmul.f32 %v2288, 3.8918573e-05
        %v2301 = vadd.f32 %v2300, 0.001143296
        %v2302 = vmul.f32 %v2288, %v2301
        %v2303 = vadd.f32 %v2302, 0.014752088
        %v2304 = vmul.f32 %v2288, %v2303
        %v2305 = vadd.f32 %v2304, 0.112945676
        %v2306 = vmul.f32 %v2288, %v2305
        %v2307 = vadd.f32 %v2306, 0.4994258
        %v2308 = vmul.f32 %v2288, %v2307
        %v2309 = vadd.f32 %v2308, 1.0
        %v2310 = vrcp.pop %v2309
        %v2311 = vmul.f32 %v2309, %v2310
        %v2312 = vsub.f32 1.0, %v2311
        %v2313 = vmul.f32 %v2310, %v2312
        %v2314 = vadd.f32 %v2310, %v2313
        %vm2315 = vweird.f32 %v2309
        %vm2316 = vweird.f32 %v2310
        %vm2317 = vmor %vm2315, %vm2316
        %v2318 = vsel %vm2317, %v2310, %v2314
        %v2319 = vand.u32 2147483647, %v2309
        %vm2320 = vcmp.eq.f32.partialorder %v2319, 8.507059e+37
        %v2321 = vand.u32 %v2309, 2147483648
        %v2322 = vor.u32 1.1754944e-38, %v2321
        %v2323 = vsel %vm2320, %v2322, %v2318
        %v2324 = vmul.f32 %v2299, %v2323
        %v2325 = vmin.f32 %v2324, 1.0
        %v2326 = vmax.f32 %v2325, -1.0
        %v2327 = vmul.f32 %v1164, %v1164
        %v2328 = vmin.f32 16.0, %v2327
        %v2329 = vmul.f32 %v2328, 2.1237322e-06
        %v2330 = vadd.f32 %v2329, 0.00028619796
        %v2331 = vmul.f32 %v2328, %v2330
        %v2332 = vadd.f32 %v2331, 0.0036580483
        %v2333 = vmul.f32 %v2328, %v2332
        %v2334 = vadd.f32 %v2333, 0.05243302
        %v2335 = vmul.f32 %v2328, %v2334
        %v2336 = vadd.f32 %v2335, 0.18741608
        %v2337 = vmul.f32 %v2328, %v2336
        %v2338 = vadd.f32 %v2337, 1.1283791
        %v2339 = vmul.f32 %v1164, %v2338
        %v2340 = vmul.f32 %v2328, 3.8918573e-05
        %v2341 = vadd.f32 %v2340, 0.001143296
        %v2342 = vmul.f32 %v2328, %v2341
        %v2343 = vadd.f32 %v2342, 0.014752088
        %v2344 = vmul.f32 %v2328, %v2343
        %v2345 = vadd.f32 %v2344, 0.112945676
        %v2346 = vmul.f32 %v2328, %v2345
        %v2347 = vadd.f32 %v2346, 0.4994258
        %v2348 = vmul.f32 %v2328, %v2347
        %v2349 = vadd.f32 %v2348, 1.0
        %v2350 = vrcp.pop %v2349
        %v2351 = vmul.f32 %v2349, %v2350
        %v2352 = vsub.f32 1.0, %v2351
        %v2353 = vmul.f32 %v2350, %v2352
        %v2354 = vadd.f32 %v2350, %v2353
        %vm2355 = vweird.f32 %v2349
        %vm2356 = vweird.f32 %v2350
        %vm2357 = vmor %vm2355, %vm2356
        %v2358 = vsel %vm2357, %v2350, %v2354
        %v2359 = vand.u32 2147483647, %v2349
        %vm2360 = vcmp.eq.f32.partialorder %v2359, 8.507059e+37
        %v2361 = vand.u32 %v2349, 2147483648
        %v2362 = vor.u32 1.1754944e-38, %v2361
        %v2363 = vsel %vm2360, %v2362, %v2358
        %v2364 = vmul.f32 %v2339, %v2363
        %v2365 = vmin.f32 %v2364, 1.0
        %v2366 = vmax.f32 %v2365, -1.0
        %v2367 = vmul.f32 %v1165, %v1165
        %v2368 = vmin.f32 16.0, %v2367
        %v2369 = vmul.f32 %v2368, 2.1237322e-06
        %v2370 = vadd.f32 %v2369, 0.00028619796
        %v2371 = vmul.f32 %v2368, %v2370
        %v2372 = vadd.f32 %v2371, 0.0036580483
        %v2373 = vmul.f32 %v2368, %v2372
        %v2374 = vadd.f32 %v2373, 0.05243302
        %v2375 = vmul.f32 %v2368, %v2374
        %v2376 = vadd.f32 %v2375, 0.18741608
        %v2377 = vmul.f32 %v2368, %v2376
        %v2378 = vadd.f32 %v2377, 1.1283791
        %v2379 = vmul.f32 %v1165, %v2378
        %v2380 = vmul.f32 %v2368, 3.8918573e-05
        %v2381 = vadd.f32 %v2380, 0.001143296
        %v2382 = vmul.f32 %v2368, %v2381
        %v2383 = vadd.f32 %v2382, 0.014752088
        %v2384 = vmul.f32 %v2368, %v2383
        %v2385 = vadd.f32 %v2384, 0.112945676
        %v2386 = vmul.f32 %v2368, %v2385
        %v2387 = vadd.f32 %v2386, 0.4994258
        %v2388 = vmul.f32 %v2368, %v2387
        %v2389 = vadd.f32 %v2388, 1.0
        %v2390 = vrcp.pop %v2389
        %v2391 = vmul.f32 %v2389, %v2390
        %v2392 = vsub.f32 1.0, %v2391
        %v2393 = vmul.f32 %v2390, %v2392
        %v2394 = vadd.f32 %v2390, %v2393
        %vm2395 = vweird.f32 %v2389
        %vm2396 = vweird.f32 %v2390
        %vm2397 = vmor %vm2395, %vm2396
        %v2398 = vsel %vm2397, %v2390, %v2394
        %v2399 = vand.u32 2147483647, %v2389
        %vm2400 = vcmp.eq.f32.partialorder %v2399, 8.507059e+37
        %v2401 = vand.u32 %v2389, 2147483648
        %v2402 = vor.u32 1.1754944e-38, %v2401
        %v2403 = vsel %vm2400, %v2402, %v2398
        %v2404 = vmul.f32 %v2379, %v2403
        %v2405 = vmin.f32 %v2404, 1.0
        %v2406 = vmax.f32 %v2405, -1.0
        %v2407 = vmul.f32 %v1166, %v1166
        %v2408 = vmin.f32 16.0, %v2407
        %v2409 = vmul.f32 %v2408, 2.1237322e-06
        %v2410 = vadd.f32 %v2409, 0.00028619796
        %v2411 = vmul.f32 %v2408, %v2410
        %v2412 = vadd.f32 %v2411, 0.0036580483
        %v2413 = vmul.f32 %v2408, %v2412
        %v2414 = vadd.f32 %v2413, 0.05243302
        %v2415 = vmul.f32 %v2408, %v2414
        %v2416 = vadd.f32 %v2415, 0.18741608
        %v2417 = vmul.f32 %v2408, %v2416
        %v2418 = vadd.f32 %v2417, 1.1283791
        %v2419 = vmul.f32 %v1166, %v2418
        %v2420 = vmul.f32 %v2408, 3.8918573e-05
        %v2421 = vadd.f32 %v2420, 0.001143296
        %v2422 = vmul.f32 %v2408, %v2421
        %v2423 = vadd.f32 %v2422, 0.014752088
        %v2424 = vmul.f32 %v2408, %v2423
        %v2425 = vadd.f32 %v2424, 0.112945676
        %v2426 = vmul.f32 %v2408, %v2425
        %v2427 = vadd.f32 %v2426, 0.4994258
        %v2428 = vmul.f32 %v2408, %v2427
        %v2429 = vadd.f32 %v2428, 1.0
        %v2430 = vrcp.pop %v2429
        %v2431 = vmul.f32 %v2429, %v2430
        %v2432 = vsub.f32 1.0, %v2431
        %v2433 = vmul.f32 %v2430, %v2432
        %v2434 = vadd.f32 %v2430, %v2433
        %vm2435 = vweird.f32 %v2429
        %vm2436 = vweird.f32 %v2430
        %vm2437 = vmor %vm2435, %vm2436
        %v2438 = vsel %vm2437, %v2430, %v2434
        %v2439 = vand.u32 2147483647, %v2429
        %vm2440 = vcmp.eq.f32.partialorder %v2439, 8.507059e+37
        %v2441 = vand.u32 %v2429, 2147483648
        %v2442 = vor.u32 1.1754944e-38, %v2441
        %v2443 = vsel %vm2440, %v2442, %v2438
        %v2444 = vmul.f32 %v2419, %v2443
        %v2445 = vmin.f32 %v2444, 1.0
        %v2446 = vmax.f32 %v2445, -1.0
        %v2447 = vadd.f32 %v1206, 1.0
        %v2448 = vadd.f32 %v1246, 1.0
        %v2449 = vadd.f32 %v1286, 1.0
        %v2450 = vadd.f32 %v1326, 1.0
        %v2451 = vadd.f32 %v1366, 1.0
        %v2452 = vadd.f32 %v1406, 1.0
        %v2453 = vadd.f32 %v1446, 1.0
        %v2454 = vadd.f32 %v1486, 1.0
        %v2455 = vadd.f32 %v1526, 1.0
        %v2456 = vadd.f32 %v1566, 1.0
        %v2457 = vadd.f32 %v1606, 1.0
        %v2458 = vadd.f32 %v1646, 1.0
        %v2459 = vadd.f32 %v1686, 1.0
        %v2460 = vadd.f32 %v1726, 1.0
        %v2461 = vadd.f32 %v1766, 1.0
        %v2462 = vadd.f32 %v1806, 1.0
        %v2463 = vadd.f32 %v1846, 1.0
        %v2464 = vadd.f32 %v1886, 1.0
        %v2465 = vadd.f32 %v1926, 1.0
        %v2466 = vadd.f32 %v1966, 1.0
        %v2467 = vadd.f32 %v2006, 1.0
        %v2468 = vadd.f32 %v2046, 1.0
        %v2469 = vadd.f32 %v2086, 1.0
        %v2470 = vadd.f32 %v2126, 1.0
        %v2471 = vadd.f32 %v2166, 1.0
        %v2472 = vadd.f32 %v2206, 1.0
        %v2473 = vadd.f32 %v2246, 1.0
        %v2474 = vadd.f32 %v2286, 1.0
        %v2475 = vadd.f32 %v2326, 1.0
        %v2476 = vadd.f32 %v2366, 1.0
        %v2477 = vadd.f32 %v2406, 1.0
        %v2478 = vadd.f32 %v2446, 1.0
        %v2479 = vmul.f32 %v1103, %v2447
        %v2480 = vmul.f32 %v1104, %v2448
        %v2481 = vmul.f32 %v1105, %v2449
        %v2482 = vmul.f32 %v1106, %v2450
        %v2483 = vmul.f32 %v1107, %v2451
        %v2484 = vmul.f32 %v1108, %v2452
        %v2485 = vmul.f32 %v1109, %v2453
        %v2486 = vmul.f32 %v1110, %v2454
        %v2487 = vmul.f32 %v1111, %v2455
        %v2488 = vmul.f32 %v1112, %v2456
        %v2489 = vmul.f32 %v1113, %v2457
        %v2490 = vmul.f32 %v1114, %v2458
        %v2491 = vmul.f32 %v1115, %v2459
        %v2492 = vmul.f32 %v1116, %v2460
        %v2493 = vmul.f32 %v1117, %v2461
        %v2494 = vmul.f32 %v1118, %v2462
        %v2495 = vmul.f32 %v1119, %v2463
        %v2496 = vmul.f32 %v1120, %v2464
        %v2497 = vmul.f32 %v1121, %v2465
        %v2498 = vmul.f32 %v1122, %v2466
        %v2499 = vmul.f32 %v1123, %v2467
        %v2500 = vmul.f32 %v1124, %v2468
        %v2501 = vmul.f32 %v1125, %v2469
        %v2502 = vmul.f32 %v1126, %v2470
        %v2503 = vmul.f32 %v1127, %v2471
        %v2504 = vmul.f32 %v1128, %v2472
        %v2505 = vmul.f32 %v1129, %v2473
        %v2506 = vmul.f32 %v1130, %v2474
        %v2507 = vmul.f32 %v1131, %v2475
        %v2508 = vmul.f32 %v1132, %v2476
        %v2509 = vmul.f32 %v1133, %v2477
        %v2510 = vmul.f32 %v1134, %v2478
        %2511 = vst [vmem:[%s222] sm:$0xff] %v2479
        %2512 = vst [vmem:[%s222 + $0x8] sm:$0xff] %v2480
        %2513 = vst [vmem:[%s222 + $0x10] sm:$0xff] %v2481
        %2514 = vst [vmem:[%s222 + $0x18] sm:$0xff] %v2482
        %2515 = vst [vmem:[%s222 + $0x20] sm:$0xff] %v2483
        %2516 = vst [vmem:[%s222 + $0x28] sm:$0xff] %v2484
        %2517 = vst [vmem:[%s222 + $0x30] sm:$0xff] %v2485
        %2518 = vst [vmem:[%s222 + $0x38] sm:$0xff] %v2486
        %2519 = vst [vmem:[%s222 + $0x40] sm:$0xff] %v2487
        %2520 = vst [vmem:[%s222 + $0x48] sm:$0xff] %v2488
        %2521 = vst [vmem:[%s222 + $0x50] sm:$0xff] %v2489
        %2522 = vst [vmem:[%s222 + $0x58] sm:$0xff] %v2490
        %2523 = vst [vmem:[%s222 + $0x60] sm:$0xff] %v2491
        %2524 = vst [vmem:[%s222 + $0x68] sm:$0xff] %v2492
        %2525 = vst [vmem:[%s222 + $0x70] sm:$0xff] %v2493
        %2526 = vst [vmem:[%s222 + $0x78] sm:$0xff] %v2494
        %2527 = vst [vmem:[%s222 + $0x80] sm:$0xff] %v2495
        %2528 = vst [vmem:[%s222 + $0x88] sm:$0xff] %v2496
        %2529 = vst [vmem:[%s222 + $0x90] sm:$0xff] %v2497
        %2530 = vst [vmem:[%s222 + $0x98] sm:$0xff] %v2498
        %2531 = vst [vmem:[%s222 + $0xa0] sm:$0xff] %v2499
        %2532 = vst [vmem:[%s222 + $0xa8] sm:$0xff] %v2500
        %2533 = vst [vmem:[%s222 + $0xb0] sm:$0xff] %v2501
        %2534 = vst [vmem:[%s222 + $0xb8] sm:$0xff] %v2502
        %2535 = vst [vmem:[%s222 + $0xc0] sm:$0xff] %v2503
        %2536 = vst [vmem:[%s222 + $0xc8] sm:$0xff] %v2504
        %2537 = vst [vmem:[%s222 + $0xd0] sm:$0xff] %v2505
        %2538 = vst [vmem:[%s222 + $0xd8] sm:$0xff] %v2506
        %2539 = vst [vmem:[%s222 + $0xe0] sm:$0xff] %v2507
        %2540 = vst [vmem:[%s222 + $0xe8] sm:$0xff] %v2508
        %2541 = vst [vmem:[%s222 + $0xf0] sm:$0xff] %v2509
        %2542 = vst [vmem:[%s222 + $0xf8] sm:$0xff] %v2510
        %s2543 = sand.u32 %s97, 1
        %s2544 = scalar_lea.sflag [#allocation4], %s2543
        %s2545 = sand.u32 %s97, 1
        %s2546 = smul.addr %s2545, 256
        %s2547 = scalar_lea.vmem [#allocation8], %s2546
        // Predicated region
        $region45: #{tpu_custom_call.1} parent=31 // pred_check
          %p2548 = pneg %p107
        $region46: #{tpu_custom_call.1} parent=31 // pred_check_branch
          %2550 = sbr.rel (%p2548) target = $region48
        $region47: #{tpu_custom_call.1} parent=31 // pred_region
          %s2551 = smul.u32 16, %s21
          %2553 = vsyncadd %s2544, 0
          %s2554 = smul.addr %s2551, 2
          %s2555 = smul.addr %s2554, 8
          %s2556 = scalar_lea.hbm %s3, %s2555
          %s2557 = sshll.u32 %s2547, 4
          %s2558 = int_to_ptr.vmem [resolvable:$true] %s2557
          %s2559 = sshll.u32 %s2556, 4
          %s2560 = int_to_ptr.hbm [resolvable:$true] %s2559
          %2565 = dma.vmem_to_hbm [thread:$0]  %s2558, 4096, %s2560, %s2544, 256, 256, 16
        $region48: #{tpu_custom_call.1} parent=31 // pred_fallthru
          _
      $region32: #{tpu_custom_call.1} parent=5 // pred_fallthru
        _
      %p2566 = scmp.le.s32.totalorder 2, %s16
      // Predicated region
      $region49: #{tpu_custom_call.1} parent=5 // pred_check
        %p2567 = pneg %p2566
      $region50: #{tpu_custom_call.1} parent=5 // pred_check_branch
        %2569 = sbr.rel (%p2567) target = $region52
      $region51: #{tpu_custom_call.1} parent=5 // pred_region
        %s2570 = ssub.s32 %s16, 2
        // Predicated region
        $region53: #{tpu_custom_call.1} parent=51 // pred_check
          %p2571 = pneg %p113
        $region54: #{tpu_custom_call.1} parent=51 // pred_check_branch
          %2573 = sbr.rel (%p2571) target = $region56
        $region55: #{tpu_custom_call.1} parent=51 // pred_region
          %s2574 = sand.u32 %s98, 1
          %s2575 = scalar_lea.sflag [#allocation4], %s2574
          %s2576 = sand.u32 %s98, 1
          %s2577 = smul.addr %s2576, 256
          %s2578 = scalar_lea.vmem [#allocation8], %s2577
          %2580 = dma.done %s2575, 4096
        $region56: #{tpu_custom_call.1} parent=51 // pred_fallthru
          _
      $region52: #{tpu_custom_call.1} parent=5 // pred_fallthru
        _
    $region6: #{tpu_custom_call.1} parent=1 // loop_footer
      %s20 = sadd.s32 1, %s16
    $region7: #{tpu_custom_call.1} parent=1 // loop_footer_branch
      %15 = sbr.rel target = $region3
    $region8: #{tpu_custom_call.1} parent=1 // loop_exit
      _
    %2581 = vsyncpa [#allocation3], 1
    %s2582 = scalar_lea.sflag [#allocation3], 1
    %2583 = vsyncpa %s2582, 1
    %2584 = vsyncpa [#allocation6], 1
    %2585 = vsyncpa [#allocation4], 1
    %s2586 = scalar_lea.sflag [#allocation4], 1
    %2587 = vsyncpa %s2586, 1

</llo_original>
